<compile_context>
chip_gen: v7x
topology: tpu7x:2x2x1
jax: 0.10.0
libtpu: 0.0.40
codegen_flags: <defaults>
</compile_context>

<pallas_src>
import math

import numpy as np

import jax
import jax.numpy as jnp
from jax.experimental import pallas as pl
from jax.experimental.pallas import tpu as pltpu


# ---------------------------------------------------------------------------
# host-side helpers (parameter sampling + bicubic weight matrices)
# ---------------------------------------------------------------------------

def _cubic(t, a=-0.75):
    """Cubic convolution kernel (PyTorch bicubic, a=-0.75). Scalar version."""
    t = abs(float(t))
    if t <= 1.0:
        return ((a + 2.0) * t - (a + 3.0)) * t * t + 1.0
    if t < 2.0:
        return (((t - 5.0) * t + 8.0) * t - 4.0) * a
    return 0.0


def _get_params(height, width, scale, ratio, rng):
    """torchvision RandomResizedCrop.get_params (host-side, numpy RNG)."""
    area = float(height * width)
    log_ratio = (math.log(ratio[0]), math.log(ratio[1]))
    for _ in range(10):
        target_area = area * float(rng.uniform(scale[0], scale[1]))
        aspect_ratio = math.exp(float(rng.uniform(log_ratio[0], log_ratio[1])))
        w = int(round(math.sqrt(target_area * aspect_ratio)))
        h = int(round(math.sqrt(target_area / aspect_ratio)))
        if 0 < w <= width and 0 < h <= height:
            i = int(rng.integers(0, height - h + 1))
            j = int(rng.integers(0, width - w + 1))
            return i, j, h, w
    # fallback: central crop with clamped aspect ratio
    in_ratio = float(width) / float(height)
    if in_ratio < min(ratio):
        w = width
        h = int(round(w / min(ratio)))
    elif in_ratio > max(ratio):
        h = height
        w = int(round(h * max(ratio)))
    else:
        w = width
        h = height
    i = (height - h) // 2
    j = (width - w) // 2
    return i, j, h, w


def _resize_weight_matrix(in_size, crop_start, crop_size, out_size, a=-0.75):
    """Dense (out_size, in_size) matrix implementing crop + bicubic resize
    along one axis (align_corners=False, edge-replicate inside the crop)."""
    m = np.zeros((out_size, in_size), np.float32)
    scale = crop_size / float(out_size)
    for o in range(out_size):
        src = (o + 0.5) * scale - 0.5          # coordinate inside the crop
        base = int(math.floor(src))
        t = src - base
        for k in range(-1, 3):
            idx = base + k
            idx = min(max(idx, 0), crop_size - 1)   # clamp to crop (replicate)
            m[o, crop_start + idx] += _cubic(t - k, a)
    return m


# ---------------------------------------------------------------------------
# Pallas kernel: out[b] = Wy @ img[b] @ WxT  (batched over a tile of channels)
# ---------------------------------------------------------------------------

def _crop_resize_kernel(wy_ref, wxt_ref, x_ref, o_ref):
    x = x_ref[...]                                            # (TB, H, W) f32
    tb = x.shape[0]
    wy = jnp.broadcast_to(wy_ref[...], (tb,) + wy_ref.shape)   # (TB, OH, H)
    wxt = jnp.broadcast_to(wxt_ref[...], (tb,) + wxt_ref.shape)  # (TB, W, OW)
    # Two batched MXU matmuls (same pattern as the flash-attention einsums).
    tmp = jnp.einsum("boh,bhw->bow", wy, x,
                     preferred_element_type=jnp.float32,
                     precision=jax.lax.Precision.HIGHEST)      # (TB, OH, W)
    out = jnp.einsum("bow,bwq->boq", tmp, wxt,
                     preferred_element_type=jnp.float32,
                     precision=jax.lax.Precision.HIGHEST)      # (TB, OH, OW)
    o_ref[...] = out.astype(o_ref.dtype)


def _block_bytes(tb, H, W, OH, OW):
    """Rough f32 VMEM footprint of one grid step (double-buffered I/O blocks,
    intermediate, broadcast weights, shared weights)."""
    return 4 * (2 * tb * H * W + 2 * tb * OH * OW + tb * OH * W
                + tb * OH * H + tb * W * OW + OH * H + W * OW)


def _pick_batch_tile(B, H, W, OH, OW, budget_bytes=12 << 20):
    """Largest divisor of B that fits the VMEM budget and (when B >= 2) keeps
    at least 2 grid steps so the second TensorCore on v7x gets work."""
    cap = B // 2 if B >= 2 else B
    best = 1
    for tb in range(1, max(cap, 1) + 1):
        if B % tb == 0 and _block_bytes(tb, H, W, OH, OW) <= budget_bytes:
            best = tb
    return best


def crop_resize_pallas(x, wy, wxt):
    """x: [N, C, H, W] f32; wy: [OH, H]; wxt: [W, OW] -> [N, C, OH, OW]."""
    N, C, H, W = x.shape
    OH = wy.shape[0]
    OW = wxt.shape[1]
    assert wy.shape == (OH, H) and wxt.shape == (W, OW)

    B = N * C
    xf = x.reshape(B, H, W)
    TB = _pick_batch_tile(B, H, W, OH, OW)
    grid = (B // TB,)

    need = _block_bytes(TB, H, W, OH, OW)
    vmem_limit = int(min(64 << 20, max(32 << 20, 2 * need)))

    out = pl.pallas_call(
        _crop_resize_kernel,
        out_shape=jax.ShapeDtypeStruct((B, OH, OW), x.dtype),
        grid=grid,
        in_specs=[
            pl.BlockSpec((OH, H), lambda b: (0, 0)),       # Wy (fetched once)
            pl.BlockSpec((W, OW), lambda b: (0, 0)),       # WxT (fetched once)
            pl.BlockSpec((TB, H, W), lambda b: (b, 0, 0)),
        ],
        out_specs=pl.BlockSpec((TB, OH, OW), lambda b: (b, 0, 0)),
        compiler_params=pltpu.CompilerParams(
            dimension_semantics=("parallel",),
            vmem_limit_bytes=vmem_limit,
        ),
    )(wy, wxt, xf)
    return out.reshape(N, C, OH, OW)


# ---------------------------------------------------------------------------
# module wrapper (list-of-PIL replaced by list of [N, C, H, W] float batches)
# ---------------------------------------------------------------------------

class ResizeCropFuc:
    """JAX/Pallas port of the PyTorch ResizeCropFuc module: sample ONE set of
    RandomResizedCrop params from the first item and apply crop+bicubic-resize
    with those params to every item in the list."""

    def __init__(self, size, scale=(0.08, 1.0), ratio=(3.0 / 4.0, 4.0 / 3.0),
                 interpolation="bicubic"):
        if isinstance(size, int):
            size = (size, size)
        self.paras = {"size": tuple(int(s) for s in size),
                      "scale": tuple(scale),
                      "ratio": tuple(ratio),
                      "interpolation": interpolation}
        self.last_params = None  # (i, j, h, w) of the most recent call

    def __call__(self, itemlist, seed=0):
        single = not isinstance(itemlist, (list, tuple))
        items = [itemlist] if single else list(itemlist)

        N, C, H, W = items[0].shape
        rng = np.random.default_rng(seed)
        i, j, h, w = _get_params(H, W, self.paras["scale"], self.paras["ratio"], rng)
        self.last_params = (i, j, h, w)

        out_h, out_w = self.paras["size"]
        wy = jnp.asarray(_resize_weight_matrix(H, i, h, out_h))          # (OH, H)
        wxt = jnp.asarray(_resize_weight_matrix(W, j, w, out_w).T)       # (W, OW)

        outs = [crop_resize_pallas(jnp.asarray(it, jnp.float32), wy, wxt)
                for it in items]
        return outs[0] if single else outs


# ---------------------------------------------------------------------------
# pure-numpy gather-based reference (independent code path) for verification
# ---------------------------------------------------------------------------

def _reference_crop_resize(x_np, i, j, h, w, out_h, out_w, a=-0.75):
    crop = x_np[:, :, i:i + h, j:j + w].astype(np.float32)
    N, C = crop.shape[:2]
    out = np.zeros((N, C, out_h, out_w), np.float32)
    sy = h / float(out_h)
    sx = w / float(out_w)
    for oy in range(out_h):
        srcy = (oy + 0.5) * sy - 0.5
        by = int(math.floor(srcy))
        ty = srcy - by
        for ox in range(out_w):
            srcx = (ox + 0.5) * sx - 0.5
            bx = int(math.floor(srcx))
            tx = srcx - bx
            acc = np.zeros((N, C), np.float32)
            for ky in range(-1, 3):
                wy_ = _cubic(ty - ky, a)
                iy = min(max(by + ky, 0), h - 1)
                for kx in range(-1, 3):
                    wx_ = _cubic(tx - kx, a)
                    ix = min(max(bx + kx, 0), w - 1)
                    acc += np.float32(wy_ * wx_) * crop[:, :, iy, ix]
            out[:, :, oy, ox] = acc
    return out


if __name__ == "__main__":
    key = jax.random.PRNGKey(0)
    k1, k2 = jax.random.split(key)
    # Two "views" (list items), each a small deterministic RGB batch in [0, 1].
    x1 = jax.random.uniform(k1, (2, 3, 16, 16), dtype=jnp.float32)
    x2 = jax.random.uniform(k2, (2, 3, 16, 16), dtype=jnp.float32)

    mod = ResizeCropFuc(size=8, scale=(0.2, 1.0), ratio=(3.0 / 4.0, 4.0 / 3.0))
    outs = mod([x1, x2], seed=0)
    outs = [jax.block_until_ready(o) for o in outs]

    i, j, h, w = mod.last_params
    for o, x in zip(outs, (x1, x2)):
        assert o.shape == (2, 3, 8, 8), o.shape
        ref = _reference_crop_resize(np.asarray(x), i, j, h, w, 8, 8)
        err = float(np.max(np.abs(np.asarray(o) - ref)))
        assert err < 1e-4, err

    print("KERNEL_OK")
</pallas_src>

<mosaic_0001>
module attributes {stable_mosaic.version = 11 : i64} {
  func.func @_crop_resize_kernel(%arg0: i32, %arg1: memref<8x16xf32, #tpu.memory_space<vmem>>, %arg2: memref<16x8xf32, #tpu.memory_space<vmem>>, %arg3: memref<3x16x16xf32, #tpu.memory_space<vmem>>, %arg4: memref<3x8x8xf32, #tpu.memory_space<vmem>>) attributes {dimension_semantics = [#tpu.dimension_semantics<parallel>], iteration_bounds = array<i64: 2>, scalar_prefetch = 0 : i64, scratch_operands = 0 : i64, tpu.core_type = #tpu.core_type<tc>, window_params = [{pipeline_mode = #tpu.pipeline_mode<synchronous>, transform_indices = @transform_0, window_bounds = array<i64: 8, 16>}, {pipeline_mode = #tpu.pipeline_mode<synchronous>, transform_indices = @transform_1, window_bounds = array<i64: 16, 8>}, {transform_indices = @transform_2, window_bounds = array<i64: 3, 16, 16>}, {transform_indices = @transform_3, window_bounds = array<i64: 3, 8, 8>}]} {
    %c0 = arith.constant 0 : index
    %c0_0 = arith.constant 0 : index
    %c0_1 = arith.constant 0 : index
    %0 = vector.load %arg3[%c0, %c0_0, %c0_1] : memref<3x16x16xf32, #tpu.memory_space<vmem>>, vector<3x16x16xf32>
    %c0_2 = arith.constant 0 : index
    %c0_3 = arith.constant 0 : index
    %1 = vector.load %arg1[%c0_2, %c0_3] : memref<8x16xf32, #tpu.memory_space<vmem>>, vector<8x16xf32>
    %2 = vector.shape_cast %1 : vector<8x16xf32> to vector<1x8x16xf32>
    %3 = vector.broadcast %2 : vector<1x8x16xf32> to vector<3x8x16xf32>
    %c0_4 = arith.constant 0 : index
    %c0_5 = arith.constant 0 : index
    %4 = vector.load %arg2[%c0_4, %c0_5] : memref<16x8xf32, #tpu.memory_space<vmem>>, vector<16x8xf32>
    %5 = vector.shape_cast %4 : vector<16x8xf32> to vector<1x16x8xf32>
    %6 = vector.broadcast %5 : vector<1x16x8xf32> to vector<3x16x8xf32>
    "tpu.trace_start"() <{level = 10 : i32, message = "boh,bhw->bow"}> : () -> ()
    %cst = arith.constant dense<0.000000e+00> : vector<3x8x16xf32>
    %7 = tpu.matmul %3, %0, %cst {dimension_numbers = #tpu.dot_dimension_numbers<[2], [1], [1], [2], [0, 0, 0, 1, 1, 2], [0], [0]>, precision = #tpu.contract_precision<fp32>} : vector<3x8x16xf32>, vector<3x16x16xf32>, vector<3x8x16xf32> -> vector<3x8x16xf32>
    "tpu.trace_stop"() : () -> ()
    "tpu.trace_start"() <{level = 10 : i32, message = "bow,bwq->boq"}> : () -> ()
    %cst_6 = arith.constant dense<0.000000e+00> : vector<3x8x8xf32>
    %8 = tpu.matmul %7, %6, %cst_6 {dimension_numbers = #tpu.dot_dimension_numbers<[2], [1], [1], [2], [0, 0, 0, 1, 1, 2], [0], [0]>, precision = #tpu.contract_precision<fp32>} : vector<3x8x16xf32>, vector<3x16x8xf32>, vector<3x8x8xf32> -> vector<3x8x8xf32>
    "tpu.trace_stop"() : () -> ()
    %c0_7 = arith.constant 0 : index
    %c0_8 = arith.constant 0 : index
    %c0_9 = arith.constant 0 : index
    %9 = vector.load %arg4[%c0_7, %c0_8, %c0_9] : memref<3x8x8xf32, #tpu.memory_space<vmem>>, vector<3x8x8xf32>
    tpu.vector_store %arg4[%c0_7, %c0_8, %c0_9], %8 {strides = array<i32>} : memref<3x8x8xf32, #tpu.memory_space<vmem>>, vector<3x8x8xf32>,
    return
  }
  func.func @transform_0(%arg0: i32) -> (i32, i32) {
    %c0_i32 = arith.constant 0 : i32
    %c0_i32_0 = arith.constant 0 : i32
    %c0_i32_1 = arith.constant 0 : i32
    return %c0_i32, %c0_i32_0 : i32, i32
  }
  func.func @transform_1(%arg0: i32) -> (i32, i32) {
    %c0_i32 = arith.constant 0 : i32
    %c0_i32_0 = arith.constant 0 : i32
    %c0_i32_1 = arith.constant 0 : i32
    return %c0_i32, %c0_i32_0 : i32, i32
  }
  func.func @transform_2(%arg0: i32) -> (i32, i32, i32) {
    %c0_i32 = arith.constant 0 : i32
    %c0_i32_0 = arith.constant 0 : i32
    %c0_i32_1 = arith.constant 0 : i32
    return %arg0, %c0_i32, %c0_i32_0 : i32, i32, i32
  }
  func.func @transform_3(%arg0: i32) -> (i32, i32, i32) {
    %c0_i32 = arith.constant 0 : i32
    %c0_i32_0 = arith.constant 0 : i32
    %c0_i32_1 = arith.constant 0 : i32
    return %arg0, %c0_i32, %c0_i32_0 : i32, i32, i32
  }
}

</mosaic_0001>

<llo_original>
// kernel: tpu_custom_call.1
$region0: #{tpu_custom_call.1}
  #allocation0 [shape = 'u32[]', space=smem, size = 0x4, offset = 0x4, fixed_abs, tag = 'smem constant byte address 0x4 - core index']
  #allocation1 [shape = 'u32[144,128]{1,0:T(1,128)}', space=vmem, size = 0x12000, scoped, tag = 'internal scratch']
  %s0 = inlined_call_operand.vmem [shape: f32[8,16], index: 0, kind: input, shape index: {}]
  %s1 = inlined_call_operand.vmem [shape: f32[16,8], index: 1, kind: input, shape index: {}]
  %s2 = inlined_call_operand.hbm [shape: f32[6,16,16], index: 2, kind: input, shape index: {}]
  %s3 = inlined_call_operand.hbm [shape: f32[6,8,8], index: 3, kind: output, shape index: {}]
  %s4 = sld [smem:[#allocation0]]
  $region49: #{tpu_custom_call.1} parent=0
    _
  %s6 = ssub.s32 1, %s4
  %s7 = scalar_select 0, %s6, %s4
  $region1: #{tpu_custom_call.1} parent=0
    #allocation2 [shape = 'u8[49152]{0}', space=vmem, size = 0xc000, scoped, tag = 'input window, operand 2']
    #allocation3 [shape = 's32[2]{0}', space=sflag, size = 0x8, scoped, tag = 'scoped memory for tpu_custom_call.1']
    #allocation4 [shape = 's32[2]{0}', space=sflag, size = 0x8, scoped, tag = 'scoped memory for tpu_custom_call.1']
    #allocation5 [shape = 'u8[24576]{0}', space=vmem, size = 0x6000, scoped, tag = 'output window, operand 0']
    %8 = vsyncpa [#allocation3], 0
    %s9 = scalar_lea.sflag [#allocation3], 1
    %10 = vsyncpa %s9, 0
    %11 = vsyncpa [#allocation4], 0
    %s12 = scalar_lea.sflag [#allocation4], 1
    %13 = vsyncpa %s12, 0
    loop: start=0, step=1, limit=4
    $region2: #{tpu_custom_call.1} parent=1 // loop_pre_header
      _
    $region3: #{tpu_custom_call.1} parent=1 // loop_header
      %s15 = sphi 0, %s19
      %p16 = scmp.ge.s32.totalorder %s15, 4
      %s23 = sphi 0, %s23
      %s25 = sphi 0, %s23
      %s26 = sphi 0, %s25
      %s40 = sphi 0, %s26
      %s44 = sphi 0, %s44
      %s46 = sphi 0, %s44
      %s47 = sphi 0, %s46
      %s61 = sphi 0, %s47
      %s67 = sphi 0, %s69
      %s70 = sphi 0, %s67
      %s71 = sphi 0, %s70
      %s87 = sphi 0, %s71
      %s93 = sphi 0, %s95
      %s96 = sphi 0, %s93
      %s97 = sphi 0, %s96
      %s113 = sphi 0, %s97
    $region4: #{tpu_custom_call.1} parent=1 // loop_header_branch
      %18 = sbr.rel (%p16) target = $region8
    $region5: #{tpu_custom_call.1} parent=1 // loop_body
      %s20 = ssub.s32 %s15, 1
      %s21 = ssub.s32 %s15, 2
      %s22 = sadd.s32 %s15, 1
      %s24 = sadd.s32 %s23, 1
      %p27 = scmp.eq.s32.totalorder %s15, 1
      %p28 = scmp.ne.s32.totalorder %s23, %s25
      %p29 = scmp.eq.s32.totalorder %s15, 0
      %p30 = por %p28, %p29
      %p31 = scmp.ne.s32.totalorder %s23, %s25
      %p32 = scmp.eq.s32.totalorder %s20, 1
      %p33 = por %p31, %p32
      %p34 = scmp.ne.s32.totalorder %s25, %s26
      %p35 = scmp.eq.s32.totalorder %s20, 0
      %p36 = por %p34, %p35
      %p37 = scmp.ne.s32.totalorder %s25, %s26
      %p38 = scmp.eq.s32.totalorder %s21, 1
      %p39 = por %p37, %p38
      %p41 = scmp.ne.s32.totalorder %s26, %s40
      %p42 = scmp.eq.s32.totalorder %s21, 0
      %p43 = por %p41, %p42
      %s45 = sadd.s32 %s44, 1
      %p48 = scmp.eq.s32.totalorder %s15, 1
      %p49 = scmp.ne.s32.totalorder %s44, %s46
      %p50 = scmp.eq.s32.totalorder %s15, 0
      %p51 = por %p49, %p50
      %p52 = scmp.ne.s32.totalorder %s44, %s46
      %p53 = scmp.eq.s32.totalorder %s20, 1
      %p54 = por %p52, %p53
      %p55 = scmp.ne.s32.totalorder %s46, %s47
      %p56 = scmp.eq.s32.totalorder %s20, 0
      %p57 = por %p55, %p56
      %p58 = scmp.ne.s32.totalorder %s46, %s47
      %p59 = scmp.eq.s32.totalorder %s21, 1
      %p60 = por %p58, %p59
      %p62 = scmp.ne.s32.totalorder %s47, %s61
      %p63 = scmp.eq.s32.totalorder %s21, 0
      %p64 = por %p62, %p63
      %s65 = ssub.s32 %s15, %s22
      %p66 = scmp.eq.s32.totalorder %s65, 0
      %s68 = sadd.s32 %s67, 1
      %s69 = scalar_select %p66, %s67, %s68
      %p72 = pneg %p66
      %p73 = scmp.eq.s32.totalorder %s15, 1
      %p74 = por %p72, %p73
      %p75 = scmp.ne.s32.totalorder %s67, %s70
      %p76 = scmp.eq.s32.totalorder %s15, 0
      %p77 = por %p75, %p76
      %p78 = scmp.ne.s32.totalorder %s67, %s70
      %p79 = scmp.eq.s32.totalorder %s20, 1
      %p80 = por %p78, %p79
      %p81 = scmp.ne.s32.totalorder %s70, %s71
      %p82 = scmp.eq.s32.totalorder %s20, 0
      %p83 = por %p81, %p82
      %p84 = scmp.ne.s32.totalorder %s70, %s71
      %p85 = scmp.eq.s32.totalorder %s21, 1
      %p86 = por %p84, %p85
      %p88 = scmp.ne.s32.totalorder %s71, %s87
      %p89 = scmp.eq.s32.totalorder %s21, 0
      %p90 = por %p88, %p89
      %s91 = ssub.s32 %s15, %s22
      %p92 = scmp.eq.s32.totalorder %s91, 0
      %s94 = sadd.s32 %s93, 1
      %s95 = scalar_select %p92, %s93, %s94
      %p98 = pneg %p92
      %p99 = scmp.eq.s32.totalorder %s15, 1
      %p100 = por %p98, %p99
      %p101 = scmp.ne.s32.totalorder %s93, %s96
      %p102 = scmp.eq.s32.totalorder %s15, 0
      %p103 = por %p101, %p102
      %p104 = scmp.ne.s32.totalorder %s93, %s96
      %p105 = scmp.eq.s32.totalorder %s20, 1
      %p106 = por %p104, %p105
      %p107 = scmp.ne.s32.totalorder %s96, %s97
      %p108 = scmp.eq.s32.totalorder %s20, 0
      %p109 = por %p107, %p108
      %p110 = scmp.ne.s32.totalorder %s96, %s97
      %p111 = scmp.eq.s32.totalorder %s21, 1
      %p112 = por %p110, %p111
      %p114 = scmp.ne.s32.totalorder %s97, %s113
      %p115 = scmp.eq.s32.totalorder %s21, 0
      %p116 = por %p114, %p115
      %p117 = scmp.le.s32.totalorder 1, %s15
      %p118 = scmp.lt.s32.totalorder %s15, 3
      %p119 = pnand %p117, %p118
      %p120 = pneg %p119
      // Predicated region
      $region9: #{tpu_custom_call.1} parent=5 // pred_check
        _
      $region10: #{tpu_custom_call.1} parent=5 // pred_check_branch
        %122 = sbr.rel (%p119) target = $region12
      $region11: #{tpu_custom_call.1} parent=5 // pred_region
        %s123 = ssub.s32 %s15, 1
        // Predicated region
        $region13: #{tpu_custom_call.1} parent=11 // pred_check
          %p124 = pneg %p36
        $region14: #{tpu_custom_call.1} parent=11 // pred_check_branch
          %126 = sbr.rel (%p124) target = $region16
        $region15: #{tpu_custom_call.1} parent=11 // pred_region
          _
        $region16: #{tpu_custom_call.1} parent=11 // pred_fallthru
          _
        // Predicated region
        $region17: #{tpu_custom_call.1} parent=11 // pred_check
          %p127 = pneg %p57
        $region18: #{tpu_custom_call.1} parent=11 // pred_check_branch
          %129 = sbr.rel (%p127) target = $region20
        $region19: #{tpu_custom_call.1} parent=11 // pred_region
          _
        $region20: #{tpu_custom_call.1} parent=11 // pred_fallthru
          _
      $region12: #{tpu_custom_call.1} parent=5 // pred_fallthru
        _
      %p130 = scmp.lt.s32.totalorder %s15, 2
      // Predicated region
      $region21: #{tpu_custom_call.1} parent=5 // pred_check
        %p131 = pneg %p130
      $region22: #{tpu_custom_call.1} parent=5 // pred_check_branch
        %133 = sbr.rel (%p131) target = $region24
      $region23: #{tpu_custom_call.1} parent=5 // pred_region
        // Predicated region
        $region25: #{tpu_custom_call.1} parent=23 // pred_check
          %p134 = pneg %p77
        $region26: #{tpu_custom_call.1} parent=23 // pred_check_branch
          %136 = sbr.rel (%p134) target = $region28
        $region27: #{tpu_custom_call.1} parent=23 // pred_region
          %s137 = sand.u32 %s67, 1
          %s138 = scalar_lea.sflag [#allocation3], %s137
          %s139 = sand.u32 %s67, 1
          %s140 = smul.addr %s139, 48
          %s141 = scalar_lea.vmem [#allocation2], %s140
          %s142 = smul.u32 3, %s15
          %s144 = ssub.s32 768, 768
          %145 = vsyncadd %s138, %s144
          %s146 = smul.addr %s142, 2
          %s147 = smul.addr %s146, 128
          %s148 = scalar_lea.hbm %s2, %s147
          %s149 = sshll.u32 %s141, 4
          %s150 = int_to_ptr.vmem [resolvable:$true] %s149
          %155 = dma.hbm_to_vmem [thread:$0]  %s148, 768, %s150, %s138, 128, 128, 8
        $region28: #{tpu_custom_call.1} parent=23 // pred_fallthru
          _
      $region24: #{tpu_custom_call.1} parent=5 // pred_fallthru
        _
      %p156 = scmp.le.s32.totalorder 1, %s15
      %p157 = scmp.lt.s32.totalorder %s15, 3
      %p158 = pnand %p156, %p157
      %p159 = pneg %p158
      // Predicated region
      $region29: #{tpu_custom_call.1} parent=5 // pred_check
        _
      $region30: #{tpu_custom_call.1} parent=5 // pred_check_branch
        %161 = sbr.rel (%p158) target = $region32
      $region31: #{tpu_custom_call.1} parent=5 // pred_region
        %s162 = ssub.s32 %s15, 1
        %s163 = sand.u32 %s70, 1
        %s164 = scalar_lea.sflag [#allocation3], %s163
        %s165 = sand.u32 %s70, 1
        %s166 = smul.addr %s165, 48
        %s167 = scalar_lea.vmem [#allocation2], %s166
        // Predicated region
        $region33: #{tpu_custom_call.1} parent=31 // pred_check
          %p168 = pneg %p83
        $region34: #{tpu_custom_call.1} parent=31 // pred_check_branch
          %170 = sbr.rel (%p168) target = $region36
        $region35: #{tpu_custom_call.1} parent=31 // pred_region
          %171 = dma.done %s164, 768
        $region36: #{tpu_custom_call.1} parent=31 // pred_fallthru
          _
        %p172 = pneg %p36
        %p173 = pneg %p33
        %p174 = pneg %p57
        %p175 = pneg %p54
        %s176 = sand.u32 %s70, 1
        %s177 = scalar_lea.sflag [#allocation3], %s176
        %s178 = sand.u32 %s70, 1
        %s179 = smul.addr %s178, 48
        %s180 = scalar_lea.vmem [#allocation2], %s179
        %p181 = pneg %p83
        %p182 = pneg %p80
        %p183 = pneg %p109
        %p184 = pneg %p106
        %s185 = sand.u32 %s96, 1
        %s186 = scalar_lea.sflag [#allocation4], %s185
        %s187 = sand.u32 %s96, 1
        %s188 = smul.addr %s187, 24
        %s189 = scalar_lea.vmem [#allocation5], %s188
        %s190 = smul.u32 3, %s20
        %s191 = smul.u32 3, %s20
        %v192 = vld [vmem:[%s167] sm:$0xff]
        %v193 = vld [vmem:[%s167 + $0x8] sm:$0xff]
        %v194 = vld [vmem:[%s167 + $0x10] sm:$0xff]
        %v195 = vld [vmem:[%s167 + $0x18] sm:$0xff]
        %v196 = vld [vmem:[%s167 + $0x20] sm:$0xff]
        %v197 = vld [vmem:[%s167 + $0x28] sm:$0xff]
        %v198 = vld [vmem:[%s0] sm:$0xff]
        %v199 = vld [vmem:[%s1] sm:$0xff]
        %v200 = vld [vmem:[%s1 + $0x8] sm:$0xff]
        %vm201 = vcmask 130048
        %v203 = vsel %vm201, %v198, 0
        %205 = vmatprep.subr.mxu0 0.0
        %v206 = vand.u32 %v192, 4294901760
        %207 = vmatpush1.msra.mxu0 %v206
        %208 = vmatprep.subr.mxu0 0.0
        %v209 = vand.u32 %v193, 4294901760
        %210 = vmatpush1.msra.mxu0 %v209
        %211 = vmatprep.subr.mxu0 0.0
        %212 = vmatpush1.msra.mxu0 0.0
        %213 = vmatprep.subr.mxu0 0.0
        %214 = vmatpush1.msra.mxu0 0.0
        %215 = vmatprep.subr.mxu0 0.0
        %216 = vmatpush1.msra.mxu0 0.0
        %217 = vmatprep.subr.mxu0 0.0
        %218 = vmatpush1.msra.mxu0 0.0
        %219 = vmatprep.subr.mxu0 0.0
        %220 = vmatpush1.msra.mxu0 0.0
        %221 = vmatprep.subr.mxu0 0.0
        %222 = vmatpush1.msra.mxu0 0.0
        %223 = vmatprep.subr.mxu0 0.0
        %224 = vmatpush1.msra.mxu0 0.0
        %225 = vmatprep.subr.mxu0 0.0
        %226 = vmatpush1.msra.mxu0 0.0
        %227 = vmatprep.subr.mxu0 0.0
        %228 = vmatpush1.msra.mxu0 0.0
        %229 = vmatprep.subr.mxu0 0.0
        %230 = vmatpush1.msra.mxu0 0.0
        %231 = vmatprep.subr.mxu0 0.0
        %232 = vmatpush1.msra.mxu0 0.0
        %233 = vmatprep.subr.mxu0 0.0
        %234 = vmatpush1.msra.mxu0 0.0
        %235 = vmatprep.subr.mxu0 0.0
        %236 = vmatpush1.msra.mxu0 0.0
        %237 = vmatprep.subr.mxu0 0.0
        %238 = vmatpush1.msra.mxu0 0.0
        %239 = vmatprep.subr.mxu0 0.0
        %240 = vmatpush1.msra.mxu0 0.0
        %241 = vmatprep.subr.mxu0 0.0
        %242 = vmatpush1.msra.mxu0 0.0
        %243 = vmatprep.subr.mxu0 0.0
        %244 = vmatpush1.msra.mxu0 0.0
        %245 = vmatprep.subr.mxu0 0.0
        %246 = vmatpush1.msra.mxu0 0.0
        %247 = vmatprep.subr.mxu0 0.0
        %248 = vmatpush1.msra.mxu0 0.0
        %249 = vmatprep.subr.mxu0 0.0
        %250 = vmatpush1.msra.mxu0 0.0
        %251 = vmatprep.subr.mxu0 0.0
        %252 = vmatpush1.msra.mxu0 0.0
        %253 = vmatprep.subr.mxu0 0.0
        %254 = vmatpush1.msra.mxu0 0.0
        %255 = vmatprep.subr.mxu0 0.0
        %256 = vmatpush1.msra.mxu0 0.0
        %257 = vmatprep.subr.mxu0 0.0
        %258 = vmatpush1.msra.mxu0 0.0
        %259 = vmatprep.subr.mxu0 0.0
        %260 = vmatpush1.msra.mxu0 0.0
        %261 = vmatprep.subr.mxu0 0.0
        %262 = vmatpush1.msra.mxu0 0.0
        %263 = vmatprep.subr.mxu0 0.0
        %264 = vmatpush1.msra.mxu0 0.0
        %265 = vmatprep.subr.mxu0 0.0
        %266 = vmatpush1.msra.mxu0 0.0
        %267 = vmatprep.subr.mxu0 0.0
        %268 = vmatpush1.msra.mxu0 0.0
        %269 = vmatprep.subr.mxu0 0.0
        %270 = vmatpush1.msra.mxu0 0.0
        %271 = vmatprep.mubr.f32.mxu0 0.0
        %v272 = vand.u32 %v203, 4294901760
        %v273 = vsub.f32 %v203, %v272
        %v274 = vand.u32 %v273, 4294901760
        %v275 = vsub.f32 %v273, %v274
        %v276 = vand.u32 %v275, 4294901760
        %277 = vmatmul.mubr.f32.gmra.mrb[0].mxu0 %v276
        %v278 = vpop.f32.mrb[0].mxu0
        %v279 = vadd.f32 0.0, %v278
        %v280 = vpop.f32.mrb[0].mxu0
        %281 = vdwg.mxu0
        %282 = vmatprep.subr.mxu0 0.0
        %v283 = vand.u32 %v192, 4294901760
        %v284 = vsub.f32 %v192, %v283
        %v285 = vand.u32 %v284, 4294901760
        %v286 = vsub.f32 %v284, %v285
        %v287 = vand.u32 %v286, 4294901760
        %288 = vmatpush1.msra.mxu0 %v287
        %289 = vmatprep.subr.mxu0 0.0
        %v290 = vand.u32 %v193, 4294901760
        %v291 = vsub.f32 %v193, %v290
        %v292 = vand.u32 %v291, 4294901760
        %v293 = vsub.f32 %v291, %v292
        %v294 = vand.u32 %v293, 4294901760
        %295 = vmatpush1.msra.mxu0 %v294
        %296 = vmatprep.subr.mxu0 0.0
        %297 = vmatpush1.msra.mxu0 0.0
        %298 = vmatprep.subr.mxu0 0.0
        %299 = vmatpush1.msra.mxu0 0.0
        %300 = vmatprep.subr.mxu0 0.0
        %301 = vmatpush1.msra.mxu0 0.0
        %302 = vmatprep.subr.mxu0 0.0
        %303 = vmatpush1.msra.mxu0 0.0
        %304 = vmatprep.subr.mxu0 0.0
        %305 = vmatpush1.msra.mxu0 0.0
        %306 = vmatprep.subr.mxu0 0.0
        %307 = vmatpush1.msra.mxu0 0.0
        %308 = vmatprep.subr.mxu0 0.0
        %309 = vmatpush1.msra.mxu0 0.0
        %310 = vmatprep.subr.mxu0 0.0
        %311 = vmatpush1.msra.mxu0 0.0
        %312 = vmatprep.subr.mxu0 0.0
        %313 = vmatpush1.msra.mxu0 0.0
        %314 = vmatprep.subr.mxu0 0.0
        %315 = vmatpush1.msra.mxu0 0.0
        %316 = vmatprep.subr.mxu0 0.0
        %317 = vmatpush1.msra.mxu0 0.0
        %318 = vmatprep.subr.mxu0 0.0
        %319 = vmatpush1.msra.mxu0 0.0
        %320 = vmatprep.subr.mxu0 0.0
        %321 = vmatpush1.msra.mxu0 0.0
        %322 = vmatprep.subr.mxu0 0.0
        %323 = vmatpush1.msra.mxu0 0.0
        %324 = vmatprep.subr.mxu0 0.0
        %325 = vmatpush1.msra.mxu0 0.0
        %326 = vmatprep.subr.mxu0 0.0
        %327 = vmatpush1.msra.mxu0 0.0
        %328 = vmatprep.subr.mxu0 0.0
        %329 = vmatpush1.msra.mxu0 0.0
        %330 = vmatprep.subr.mxu0 0.0
        %331 = vmatpush1.msra.mxu0 0.0
        %332 = vmatprep.subr.mxu0 0.0
        %333 = vmatpush1.msra.mxu0 0.0
        %334 = vmatprep.subr.mxu0 0.0
        %335 = vmatpush1.msra.mxu0 0.0
        %336 = vmatprep.subr.mxu0 0.0
        %337 = vmatpush1.msra.mxu0 0.0
        %338 = vmatprep.subr.mxu0 0.0
        %339 = vmatpush1.msra.mxu0 0.0
        %340 = vmatprep.subr.mxu0 0.0
        %341 = vmatpush1.msra.mxu0 0.0
        %342 = vmatprep.subr.mxu0 0.0
        %343 = vmatpush1.msra.mxu0 0.0
        %344 = vmatprep.subr.mxu0 0.0
        %345 = vmatpush1.msra.mxu0 0.0
        %346 = vmatprep.subr.mxu0 0.0
        %347 = vmatpush1.msra.mxu0 0.0
        %348 = vmatprep.subr.mxu0 0.0
        %349 = vmatpush1.msra.mxu0 0.0
        %350 = vmatprep.subr.mxu0 0.0
        %351 = vmatpush1.msra.mxu0 0.0
        %352 = vmatprep.subr.mxu0 0.0
        %353 = vmatpush1.msra.mxu0 0.0
        %354 = vmatprep.subr.mxu0 0.0
        %355 = vmatpush1.msra.mxu0 0.0
        %356 = vmatprep.mubr.f32.mxu0 0.0
        %v357 = vand.u32 %v203, 4294901760
        %358 = vmatmul.mubr.f32.gmra.mrb[0].mxu0 %v357
        %v359 = vpop.f32.mrb[0].mxu0
        %v360 = vadd.f32 %v279, %v359
        %v361 = vpop.f32.mrb[0].mxu0
        %362 = vdwg.mxu0
        %363 = vmatprep.subr.mxu0 0.0
        %v364 = vand.u32 %v192, 4294901760
        %v365 = vsub.f32 %v192, %v364
        %366 = vmatpush1.msra.mxu0 %v365
        %367 = vmatprep.subr.mxu0 0.0
        %v368 = vand.u32 %v193, 4294901760
        %v369 = vsub.f32 %v193, %v368
        %370 = vmatpush1.msra.mxu0 %v369
        %371 = vmatprep.subr.mxu0 0.0
        %372 = vmatpush1.msra.mxu0 0.0
        %373 = vmatprep.subr.mxu0 0.0
        %374 = vmatpush1.msra.mxu0 0.0
        %375 = vmatprep.subr.mxu0 0.0
        %376 = vmatpush1.msra.mxu0 0.0
        %377 = vmatprep.subr.mxu0 0.0
        %378 = vmatpush1.msra.mxu0 0.0
        %379 = vmatprep.subr.mxu0 0.0
        %380 = vmatpush1.msra.mxu0 0.0
        %381 = vmatprep.subr.mxu0 0.0
        %382 = vmatpush1.msra.mxu0 0.0
        %383 = vmatprep.subr.mxu0 0.0
        %384 = vmatpush1.msra.mxu0 0.0
        %385 = vmatprep.subr.mxu0 0.0
        %386 = vmatpush1.msra.mxu0 0.0
        %387 = vmatprep.subr.mxu0 0.0
        %388 = vmatpush1.msra.mxu0 0.0
        %389 = vmatprep.subr.mxu0 0.0
        %390 = vmatpush1.msra.mxu0 0.0
        %391 = vmatprep.subr.mxu0 0.0
        %392 = vmatpush1.msra.mxu0 0.0
        %393 = vmatprep.subr.mxu0 0.0
        %394 = vmatpush1.msra.mxu0 0.0
        %395 = vmatprep.subr.mxu0 0.0
        %396 = vmatpush1.msra.mxu0 0.0
        %397 = vmatprep.subr.mxu0 0.0
        %398 = vmatpush1.msra.mxu0 0.0
        %399 = vmatprep.subr.mxu0 0.0
        %400 = vmatpush1.msra.mxu0 0.0
        %401 = vmatprep.subr.mxu0 0.0
        %402 = vmatpush1.msra.mxu0 0.0
        %403 = vmatprep.subr.mxu0 0.0
        %404 = vmatpush1.msra.mxu0 0.0
        %405 = vmatprep.subr.mxu0 0.0
        %406 = vmatpush1.msra.mxu0 0.0
        %407 = vmatprep.subr.mxu0 0.0
        %408 = vmatpush1.msra.mxu0 0.0
        %409 = vmatprep.subr.mxu0 0.0
        %410 = vmatpush1.msra.mxu0 0.0
        %411 = vmatprep.subr.mxu0 0.0
        %412 = vmatpush1.msra.mxu0 0.0
        %413 = vmatprep.subr.mxu0 0.0
        %414 = vmatpush1.msra.mxu0 0.0
        %415 = vmatprep.subr.mxu0 0.0
        %416 = vmatpush1.msra.mxu0 0.0
        %417 = vmatprep.subr.mxu0 0.0
        %418 = vmatpush1.msra.mxu0 0.0
        %419 = vmatprep.subr.mxu0 0.0
        %420 = vmatpush1.msra.mxu0 0.0
        %421 = vmatprep.subr.mxu0 0.0
        %422 = vmatpush1.msra.mxu0 0.0
        %423 = vmatprep.subr.mxu0 0.0
        %424 = vmatpush1.msra.mxu0 0.0
        %425 = vmatprep.subr.mxu0 0.0
        %426 = vmatpush1.msra.mxu0 0.0
        %427 = vmatprep.subr.mxu0 0.0
        %428 = vmatpush1.msra.mxu0 0.0
        %429 = vmatprep.subr.mxu0 0.0
        %430 = vmatpush1.msra.mxu0 0.0
        %431 = vmatprep.mubr.f32.mxu0 0.0
        %v432 = vand.u32 %v203, 4294901760
        %v433 = vsub.f32 %v203, %v432
        %434 = vmatmul.mubr.f32.gmra.mrb[0].mxu0 %v433
        %v435 = vpop.f32.mrb[0].mxu0
        %v436 = vadd.f32 %v360, %v435
        %v437 = vpop.f32.mrb[0].mxu0
        %438 = vdwg.mxu0
        %439 = vmatprep.subr.mxu0 0.0
        %v440 = vand.u32 %v192, 4294901760
        %441 = vmatpush1.msra.mxu0 %v440
        %442 = vmatprep.subr.mxu0 0.0
        %v443 = vand.u32 %v193, 4294901760
        %444 = vmatpush1.msra.mxu0 %v443
        %445 = vmatprep.subr.mxu0 0.0
        %446 = vmatpush1.msra.mxu0 0.0
        %447 = vmatprep.subr.mxu0 0.0
        %448 = vmatpush1.msra.mxu0 0.0
        %449 = vmatprep.subr.mxu0 0.0
        %450 = vmatpush1.msra.mxu0 0.0
        %451 = vmatprep.subr.mxu0 0.0
        %452 = vmatpush1.msra.mxu0 0.0
        %453 = vmatprep.subr.mxu0 0.0
        %454 = vmatpush1.msra.mxu0 0.0
        %455 = vmatprep.subr.mxu0 0.0
        %456 = vmatpush1.msra.mxu0 0.0
        %457 = vmatprep.subr.mxu0 0.0
        %458 = vmatpush1.msra.mxu0 0.0
        %459 = vmatprep.subr.mxu0 0.0
        %460 = vmatpush1.msra.mxu0 0.0
        %461 = vmatprep.subr.mxu0 0.0
        %462 = vmatpush1.msra.mxu0 0.0
        %463 = vmatprep.subr.mxu0 0.0
        %464 = vmatpush1.msra.mxu0 0.0
        %465 = vmatprep.subr.mxu0 0.0
        %466 = vmatpush1.msra.mxu0 0.0
        %467 = vmatprep.subr.mxu0 0.0
        %468 = vmatpush1.msra.mxu0 0.0
        %469 = vmatprep.subr.mxu0 0.0
        %470 = vmatpush1.msra.mxu0 0.0
        %471 = vmatprep.subr.mxu0 0.0
        %472 = vmatpush1.msra.mxu0 0.0
        %473 = vmatprep.subr.mxu0 0.0
        %474 = vmatpush1.msra.mxu0 0.0
        %475 = vmatprep.subr.mxu0 0.0
        %476 = vmatpush1.msra.mxu0 0.0
        %477 = vmatprep.subr.mxu0 0.0
        %478 = vmatpush1.msra.mxu0 0.0
        %479 = vmatprep.subr.mxu0 0.0
        %480 = vmatpush1.msra.mxu0 0.0
        %481 = vmatprep.subr.mxu0 0.0
        %482 = vmatpush1.msra.mxu0 0.0
        %483 = vmatprep.subr.mxu0 0.0
        %484 = vmatpush1.msra.mxu0 0.0
        %485 = vmatprep.subr.mxu0 0.0
        %486 = vmatpush1.msra.mxu0 0.0
        %487 = vmatprep.subr.mxu0 0.0
        %488 = vmatpush1.msra.mxu0 0.0
        %489 = vmatprep.subr.mxu0 0.0
        %490 = vmatpush1.msra.mxu0 0.0
        %491 = vmatprep.subr.mxu0 0.0
        %492 = vmatpush1.msra.mxu0 0.0
        %493 = vmatprep.subr.mxu0 0.0
        %494 = vmatpush1.msra.mxu0 0.0
        %495 = vmatprep.subr.mxu0 0.0
        %496 = vmatpush1.msra.mxu0 0.0
        %497 = vmatprep.subr.mxu0 0.0
        %498 = vmatpush1.msra.mxu0 0.0
        %499 = vmatprep.subr.mxu0 0.0
        %500 = vmatpush1.msra.mxu0 0.0
        %501 = vmatprep.subr.mxu0 0.0
        %502 = vmatpush1.msra.mxu0 0.0
        %503 = vmatprep.subr.mxu0 0.0
        %504 = vmatpush1.msra.mxu0 0.0
        %505 = vmatprep.mubr.f32.mxu0 0.0
        %v506 = vand.u32 %v203, 4294901760
        %v507 = vsub.f32 %v203, %v506
        %v508 = vand.u32 %v507, 4294901760
        %509 = vmatmul.mubr.f32.gmra.mrb[0].mxu0 %v508
        %v510 = vpop.f32.mrb[0].mxu0
        %v511 = vadd.f32 %v436, %v510
        %v512 = vpop.f32.mrb[0].mxu0
        %513 = vdwg.mxu0
        %514 = vmatprep.subr.mxu0 0.0
        %v515 = vand.u32 %v192, 4294901760
        %v516 = vsub.f32 %v192, %v515
        %v517 = vand.u32 %v516, 4294901760
        %518 = vmatpush1.msra.mxu0 %v517
        %519 = vmatprep.subr.mxu0 0.0
        %v520 = vand.u32 %v193, 4294901760
        %v521 = vsub.f32 %v193, %v520
        %v522 = vand.u32 %v521, 4294901760
        %523 = vmatpush1.msra.mxu0 %v522
        %524 = vmatprep.subr.mxu0 0.0
        %525 = vmatpush1.msra.mxu0 0.0
        %526 = vmatprep.subr.mxu0 0.0
        %527 = vmatpush1.msra.mxu0 0.0
        %528 = vmatprep.subr.mxu0 0.0
        %529 = vmatpush1.msra.mxu0 0.0
        %530 = vmatprep.subr.mxu0 0.0
        %531 = vmatpush1.msra.mxu0 0.0
        %532 = vmatprep.subr.mxu0 0.0
        %533 = vmatpush1.msra.mxu0 0.0
        %534 = vmatprep.subr.mxu0 0.0
        %535 = vmatpush1.msra.mxu0 0.0
        %536 = vmatprep.subr.mxu0 0.0
        %537 = vmatpush1.msra.mxu0 0.0
        %538 = vmatprep.subr.mxu0 0.0
        %539 = vmatpush1.msra.mxu0 0.0
        %540 = vmatprep.subr.mxu0 0.0
        %541 = vmatpush1.msra.mxu0 0.0
        %542 = vmatprep.subr.mxu0 0.0
        %543 = vmatpush1.msra.mxu0 0.0
        %544 = vmatprep.subr.mxu0 0.0
        %545 = vmatpush1.msra.mxu0 0.0
        %546 = vmatprep.subr.mxu0 0.0
        %547 = vmatpush1.msra.mxu0 0.0
        %548 = vmatprep.subr.mxu0 0.0
        %549 = vmatpush1.msra.mxu0 0.0
        %550 = vmatprep.subr.mxu0 0.0
        %551 = vmatpush1.msra.mxu0 0.0
        %552 = vmatprep.subr.mxu0 0.0
        %553 = vmatpush1.msra.mxu0 0.0
        %554 = vmatprep.subr.mxu0 0.0
        %555 = vmatpush1.msra.mxu0 0.0
        %556 = vmatprep.subr.mxu0 0.0
        %557 = vmatpush1.msra.mxu0 0.0
        %558 = vmatprep.subr.mxu0 0.0
        %559 = vmatpush1.msra.mxu0 0.0
        %560 = vmatprep.subr.mxu0 0.0
        %561 = vmatpush1.msra.mxu0 0.0
        %562 = vmatprep.subr.mxu0 0.0
        %563 = vmatpush1.msra.mxu0 0.0
        %564 = vmatprep.subr.mxu0 0.0
        %565 = vmatpush1.msra.mxu0 0.0
        %566 = vmatprep.subr.mxu0 0.0
        %567 = vmatpush1.msra.mxu0 0.0
        %568 = vmatprep.subr.mxu0 0.0
        %569 = vmatpush1.msra.mxu0 0.0
        %570 = vmatprep.subr.mxu0 0.0
        %571 = vmatpush1.msra.mxu0 0.0
        %572 = vmatprep.subr.mxu0 0.0
        %573 = vmatpush1.msra.mxu0 0.0
        %574 = vmatprep.subr.mxu0 0.0
        %575 = vmatpush1.msra.mxu0 0.0
        %576 = vmatprep.subr.mxu0 0.0
        %577 = vmatpush1.msra.mxu0 0.0
        %578 = vmatprep.subr.mxu0 0.0
        %579 = vmatpush1.msra.mxu0 0.0
        %580 = vmatprep.subr.mxu0 0.0
        %581 = vmatpush1.msra.mxu0 0.0
        %582 = vmatprep.subr.mxu0 0.0
        %583 = vmatpush1.msra.mxu0 0.0
        %584 = vmatprep.mubr.f32.mxu0 0.0
        %v585 = vand.u32 %v203, 4294901760
        %586 = vmatmul.mubr.f32.gmra.mrb[0].mxu0 %v585
        %v587 = vpop.f32.mrb[0].mxu0
        %v588 = vadd.f32 %v511, %v587
        %v589 = vpop.f32.mrb[0].mxu0
        %590 = vdwg.mxu0
        %591 = vmatprep.subr.mxu0 0.0
        %v592 = vand.u32 %v192, 4294901760
        %593 = vmatpush1.msra.mxu0 %v592
        %594 = vmatprep.subr.mxu0 0.0
        %v595 = vand.u32 %v193, 4294901760
        %596 = vmatpush1.msra.mxu0 %v595
        %597 = vmatprep.subr.mxu0 0.0
        %598 = vmatpush1.msra.mxu0 0.0
        %599 = vmatprep.subr.mxu0 0.0
        %600 = vmatpush1.msra.mxu0 0.0
        %601 = vmatprep.subr.mxu0 0.0
        %602 = vmatpush1.msra.mxu0 0.0
        %603 = vmatprep.subr.mxu0 0.0
        %604 = vmatpush1.msra.mxu0 0.0
        %605 = vmatprep.subr.mxu0 0.0
        %606 = vmatpush1.msra.mxu0 0.0
        %607 = vmatprep.subr.mxu0 0.0
        %608 = vmatpush1.msra.mxu0 0.0
        %609 = vmatprep.subr.mxu0 0.0
        %610 = vmatpush1.msra.mxu0 0.0
        %611 = vmatprep.subr.mxu0 0.0
        %612 = vmatpush1.msra.mxu0 0.0
        %613 = vmatprep.subr.mxu0 0.0
        %614 = vmatpush1.msra.mxu0 0.0
        %615 = vmatprep.subr.mxu0 0.0
        %616 = vmatpush1.msra.mxu0 0.0
        %617 = vmatprep.subr.mxu0 0.0
        %618 = vmatpush1.msra.mxu0 0.0
        %619 = vmatprep.subr.mxu0 0.0
        %620 = vmatpush1.msra.mxu0 0.0
        %621 = vmatprep.subr.mxu0 0.0
        %622 = vmatpush1.msra.mxu0 0.0
        %623 = vmatprep.subr.mxu0 0.0
        %624 = vmatpush1.msra.mxu0 0.0
        %625 = vmatprep.subr.mxu0 0.0
        %626 = vmatpush1.msra.mxu0 0.0
        %627 = vmatprep.subr.mxu0 0.0
        %628 = vmatpush1.msra.mxu0 0.0
        %629 = vmatprep.subr.mxu0 0.0
        %630 = vmatpush1.msra.mxu0 0.0
        %631 = vmatprep.subr.mxu0 0.0
        %632 = vmatpush1.msra.mxu0 0.0
        %633 = vmatprep.subr.mxu0 0.0
        %634 = vmatpush1.msra.mxu0 0.0
        %635 = vmatprep.subr.mxu0 0.0
        %636 = vmatpush1.msra.mxu0 0.0
        %637 = vmatprep.subr.mxu0 0.0
        %638 = vmatpush1.msra.mxu0 0.0
        %639 = vmatprep.subr.mxu0 0.0
        %640 = vmatpush1.msra.mxu0 0.0
        %641 = vmatprep.subr.mxu0 0.0
        %642 = vmatpush1.msra.mxu0 0.0
        %643 = vmatprep.subr.mxu0 0.0
        %644 = vmatpush1.msra.mxu0 0.0
        %645 = vmatprep.subr.mxu0 0.0
        %646 = vmatpush1.msra.mxu0 0.0
        %647 = vmatprep.subr.mxu0 0.0
        %648 = vmatpush1.msra.mxu0 0.0
        %649 = vmatprep.subr.mxu0 0.0
        %650 = vmatpush1.msra.mxu0 0.0
        %651 = vmatprep.subr.mxu0 0.0
        %652 = vmatpush1.msra.mxu0 0.0
        %653 = vmatprep.subr.mxu0 0.0
        %654 = vmatpush1.msra.mxu0 0.0
        %655 = vmatprep.subr.mxu0 0.0
        %656 = vmatpush1.msra.mxu0 0.0
        %657 = vmatprep.mubr.f32.mxu0 0.0
        %v658 = vand.u32 %v203, 4294901760
        %659 = vmatmul.mubr.f32.gmra.mrb[0].mxu0 %v658
        %v660 = vpop.f32.mrb[0].mxu0
        %v661 = vadd.f32 %v588, %v660
        %v662 = vpop.f32.mrb[0].mxu0
        %663 = vdwg.mxu0
        %664 = vmatprep.subr.mxu0 0.0
        %v665 = vand.u32 %v194, 4294901760
        %666 = vmatpush1.msra.mxu0 %v665
        %667 = vmatprep.subr.mxu0 0.0
        %v668 = vand.u32 %v195, 4294901760
        %669 = vmatpush1.msra.mxu0 %v668
        %670 = vmatprep.subr.mxu0 0.0
        %671 = vmatpush1.msra.mxu0 0.0
        %672 = vmatprep.subr.mxu0 0.0
        %673 = vmatpush1.msra.mxu0 0.0
        %674 = vmatprep.subr.mxu0 0.0
        %675 = vmatpush1.msra.mxu0 0.0
        %676 = vmatprep.subr.mxu0 0.0
        %677 = vmatpush1.msra.mxu0 0.0
        %678 = vmatprep.subr.mxu0 0.0
        %679 = vmatpush1.msra.mxu0 0.0
        %680 = vmatprep.subr.mxu0 0.0
        %681 = vmatpush1.msra.mxu0 0.0
        %682 = vmatprep.subr.mxu0 0.0
        %683 = vmatpush1.msra.mxu0 0.0
        %684 = vmatprep.subr.mxu0 0.0
        %685 = vmatpush1.msra.mxu0 0.0
        %686 = vmatprep.subr.mxu0 0.0
        %687 = vmatpush1.msra.mxu0 0.0
        %688 = vmatprep.subr.mxu0 0.0
        %689 = vmatpush1.msra.mxu0 0.0
        %690 = vmatprep.subr.mxu0 0.0
        %691 = vmatpush1.msra.mxu0 0.0
        %692 = vmatprep.subr.mxu0 0.0
        %693 = vmatpush1.msra.mxu0 0.0
        %694 = vmatprep.subr.mxu0 0.0
        %695 = vmatpush1.msra.mxu0 0.0
        %696 = vmatprep.subr.mxu0 0.0
        %697 = vmatpush1.msra.mxu0 0.0
        %698 = vmatprep.subr.mxu0 0.0
        %699 = vmatpush1.msra.mxu0 0.0
        %700 = vmatprep.subr.mxu0 0.0
        %701 = vmatpush1.msra.mxu0 0.0
        %702 = vmatprep.subr.mxu0 0.0
        %703 = vmatpush1.msra.mxu0 0.0
        %704 = vmatprep.subr.mxu0 0.0
        %705 = vmatpush1.msra.mxu0 0.0
        %706 = vmatprep.subr.mxu0 0.0
        %707 = vmatpush1.msra.mxu0 0.0
        %708 = vmatprep.subr.mxu0 0.0
        %709 = vmatpush1.msra.mxu0 0.0
        %710 = vmatprep.subr.mxu0 0.0
        %711 = vmatpush1.msra.mxu0 0.0
        %712 = vmatprep.subr.mxu0 0.0
        %713 = vmatpush1.msra.mxu0 0.0
        %714 = vmatprep.subr.mxu0 0.0
        %715 = vmatpush1.msra.mxu0 0.0
        %716 = vmatprep.subr.mxu0 0.0
        %717 = vmatpush1.msra.mxu0 0.0
        %718 = vmatprep.subr.mxu0 0.0
        %719 = vmatpush1.msra.mxu0 0.0
        %720 = vmatprep.subr.mxu0 0.0
        %721 = vmatpush1.msra.mxu0 0.0
        %722 = vmatprep.subr.mxu0 0.0
        %723 = vmatpush1.msra.mxu0 0.0
        %724 = vmatprep.subr.mxu0 0.0
        %725 = vmatpush1.msra.mxu0 0.0
        %726 = vmatprep.subr.mxu0 0.0
        %727 = vmatpush1.msra.mxu0 0.0
        %728 = vmatprep.subr.mxu0 0.0
        %729 = vmatpush1.msra.mxu0 0.0
        %730 = vmatprep.mubr.f32.mxu0 0.0
        %v731 = vand.u32 %v203, 4294901760
        %v732 = vsub.f32 %v203, %v731
        %v733 = vand.u32 %v732, 4294901760
        %v734 = vsub.f32 %v732, %v733
        %v735 = vand.u32 %v734, 4294901760
        %736 = vmatmul.mubr.f32.gmra.mrb[0].mxu0 %v735
        %v737 = vpop.f32.mrb[0].mxu0
        %v738 = vadd.f32 0.0, %v737
        %v739 = vpop.f32.mrb[0].mxu0
        %740 = vdwg.mxu0
        %741 = vmatprep.subr.mxu0 0.0
        %v742 = vand.u32 %v194, 4294901760
        %v743 = vsub.f32 %v194, %v742
        %v744 = vand.u32 %v743, 4294901760
        %v745 = vsub.f32 %v743, %v744
        %v746 = vand.u32 %v745, 4294901760
        %747 = vmatpush1.msra.mxu0 %v746
        %748 = vmatprep.subr.mxu0 0.0
        %v749 = vand.u32 %v195, 4294901760
        %v750 = vsub.f32 %v195, %v749
        %v751 = vand.u32 %v750, 4294901760
        %v752 = vsub.f32 %v750, %v751
        %v753 = vand.u32 %v752, 4294901760
        %754 = vmatpush1.msra.mxu0 %v753
        %755 = vmatprep.subr.mxu0 0.0
        %756 = vmatpush1.msra.mxu0 0.0
        %757 = vmatprep.subr.mxu0 0.0
        %758 = vmatpush1.msra.mxu0 0.0
        %759 = vmatprep.subr.mxu0 0.0
        %760 = vmatpush1.msra.mxu0 0.0
        %761 = vmatprep.subr.mxu0 0.0
        %762 = vmatpush1.msra.mxu0 0.0
        %763 = vmatprep.subr.mxu0 0.0
        %764 = vmatpush1.msra.mxu0 0.0
        %765 = vmatprep.subr.mxu0 0.0
        %766 = vmatpush1.msra.mxu0 0.0
        %767 = vmatprep.subr.mxu0 0.0
        %768 = vmatpush1.msra.mxu0 0.0
        %769 = vmatprep.subr.mxu0 0.0
        %770 = vmatpush1.msra.mxu0 0.0
        %771 = vmatprep.subr.mxu0 0.0
        %772 = vmatpush1.msra.mxu0 0.0
        %773 = vmatprep.subr.mxu0 0.0
        %774 = vmatpush1.msra.mxu0 0.0
        %775 = vmatprep.subr.mxu0 0.0
        %776 = vmatpush1.msra.mxu0 0.0
        %777 = vmatprep.subr.mxu0 0.0
        %778 = vmatpush1.msra.mxu0 0.0
        %779 = vmatprep.subr.mxu0 0.0
        %780 = vmatpush1.msra.mxu0 0.0
        %781 = vmatprep.subr.mxu0 0.0
        %782 = vmatpush1.msra.mxu0 0.0
        %783 = vmatprep.subr.mxu0 0.0
        %784 = vmatpush1.msra.mxu0 0.0
        %785 = vmatprep.subr.mxu0 0.0
        %786 = vmatpush1.msra.mxu0 0.0
        %787 = vmatprep.subr.mxu0 0.0
        %788 = vmatpush1.msra.mxu0 0.0
        %789 = vmatprep.subr.mxu0 0.0
        %790 = vmatpush1.msra.mxu0 0.0
        %791 = vmatprep.subr.mxu0 0.0
        %792 = vmatpush1.msra.mxu0 0.0
        %793 = vmatprep.subr.mxu0 0.0
        %794 = vmatpush1.msra.mxu0 0.0
        %795 = vmatprep.subr.mxu0 0.0
        %796 = vmatpush1.msra.mxu0 0.0
        %797 = vmatprep.subr.mxu0 0.0
        %798 = vmatpush1.msra.mxu0 0.0
        %799 = vmatprep.subr.mxu0 0.0
        %800 = vmatpush1.msra.mxu0 0.0
        %801 = vmatprep.subr.mxu0 0.0
        %802 = vmatpush1.msra.mxu0 0.0
        %803 = vmatprep.subr.mxu0 0.0
        %804 = vmatpush1.msra.mxu0 0.0
        %805 = vmatprep.subr.mxu0 0.0
        %806 = vmatpush1.msra.mxu0 0.0
        %807 = vmatprep.subr.mxu0 0.0
        %808 = vmatpush1.msra.mxu0 0.0
        %809 = vmatprep.subr.mxu0 0.0
        %810 = vmatpush1.msra.mxu0 0.0
        %811 = vmatprep.subr.mxu0 0.0
        %812 = vmatpush1.msra.mxu0 0.0
        %813 = vmatprep.subr.mxu0 0.0
        %814 = vmatpush1.msra.mxu0 0.0
        %815 = vmatprep.mubr.f32.mxu0 0.0
        %v816 = vand.u32 %v203, 4294901760
        %817 = vmatmul.mubr.f32.gmra.mrb[0].mxu0 %v816
        %v818 = vpop.f32.mrb[0].mxu0
        %v819 = vadd.f32 %v738, %v818
        %v820 = vpop.f32.mrb[0].mxu0
        %821 = vdwg.mxu0
        %822 = vmatprep.subr.mxu0 0.0
        %v823 = vand.u32 %v194, 4294901760
        %v824 = vsub.f32 %v194, %v823
        %825 = vmatpush1.msra.mxu0 %v824
        %826 = vmatprep.subr.mxu0 0.0
        %v827 = vand.u32 %v195, 4294901760
        %v828 = vsub.f32 %v195, %v827
        %829 = vmatpush1.msra.mxu0 %v828
        %830 = vmatprep.subr.mxu0 0.0
        %831 = vmatpush1.msra.mxu0 0.0
        %832 = vmatprep.subr.mxu0 0.0
        %833 = vmatpush1.msra.mxu0 0.0
        %834 = vmatprep.subr.mxu0 0.0
        %835 = vmatpush1.msra.mxu0 0.0
        %836 = vmatprep.subr.mxu0 0.0
        %837 = vmatpush1.msra.mxu0 0.0
        %838 = vmatprep.subr.mxu0 0.0
        %839 = vmatpush1.msra.mxu0 0.0
        %840 = vmatprep.subr.mxu0 0.0
        %841 = vmatpush1.msra.mxu0 0.0
        %842 = vmatprep.subr.mxu0 0.0
        %843 = vmatpush1.msra.mxu0 0.0
        %844 = vmatprep.subr.mxu0 0.0
        %845 = vmatpush1.msra.mxu0 0.0
        %846 = vmatprep.subr.mxu0 0.0
        %847 = vmatpush1.msra.mxu0 0.0
        %848 = vmatprep.subr.mxu0 0.0
        %849 = vmatpush1.msra.mxu0 0.0
        %850 = vmatprep.subr.mxu0 0.0
        %851 = vmatpush1.msra.mxu0 0.0
        %852 = vmatprep.subr.mxu0 0.0
        %853 = vmatpush1.msra.mxu0 0.0
        %854 = vmatprep.subr.mxu0 0.0
        %855 = vmatpush1.msra.mxu0 0.0
        %856 = vmatprep.subr.mxu0 0.0
        %857 = vmatpush1.msra.mxu0 0.0
        %858 = vmatprep.subr.mxu0 0.0
        %859 = vmatpush1.msra.mxu0 0.0
        %860 = vmatprep.subr.mxu0 0.0
        %861 = vmatpush1.msra.mxu0 0.0
        %862 = vmatprep.subr.mxu0 0.0
        %863 = vmatpush1.msra.mxu0 0.0
        %864 = vmatprep.subr.mxu0 0.0
        %865 = vmatpush1.msra.mxu0 0.0
        %866 = vmatprep.subr.mxu0 0.0
        %867 = vmatpush1.msra.mxu0 0.0
        %868 = vmatprep.subr.mxu0 0.0
        %869 = vmatpush1.msra.mxu0 0.0
        %870 = vmatprep.subr.mxu0 0.0
        %871 = vmatpush1.msra.mxu0 0.0
        %872 = vmatprep.subr.mxu0 0.0
        %873 = vmatpush1.msra.mxu0 0.0
        %874 = vmatprep.subr.mxu0 0.0
        %875 = vmatpush1.msra.mxu0 0.0
        %876 = vmatprep.subr.mxu0 0.0
        %877 = vmatpush1.msra.mxu0 0.0
        %878 = vmatprep.subr.mxu0 0.0
        %879 = vmatpush1.msra.mxu0 0.0
        %880 = vmatprep.subr.mxu0 0.0
        %881 = vmatpush1.msra.mxu0 0.0
        %882 = vmatprep.subr.mxu0 0.0
        %883 = vmatpush1.msra.mxu0 0.0
        %884 = vmatprep.subr.mxu0 0.0
        %885 = vmatpush1.msra.mxu0 0.0
        %886 = vmatprep.subr.mxu0 0.0
        %887 = vmatpush1.msra.mxu0 0.0
        %888 = vmatprep.subr.mxu0 0.0
        %889 = vmatpush1.msra.mxu0 0.0
        %890 = vmatprep.mubr.f32.mxu0 0.0
        %v891 = vand.u32 %v203, 4294901760
        %v892 = vsub.f32 %v203, %v891
        %893 = vmatmul.mubr.f32.gmra.mrb[0].mxu0 %v892
        %v894 = vpop.f32.mrb[0].mxu0
        %v895 = vadd.f32 %v819, %v894
        %v896 = vpop.f32.mrb[0].mxu0
        %897 = vdwg.mxu0
        %898 = vmatprep.subr.mxu0 0.0
        %v899 = vand.u32 %v194, 4294901760
        %900 = vmatpush1.msra.mxu0 %v899
        %901 = vmatprep.subr.mxu0 0.0
        %v902 = vand.u32 %v195, 4294901760
        %903 = vmatpush1.msra.mxu0 %v902
        %904 = vmatprep.subr.mxu0 0.0
        %905 = vmatpush1.msra.mxu0 0.0
        %906 = vmatprep.subr.mxu0 0.0
        %907 = vmatpush1.msra.mxu0 0.0
        %908 = vmatprep.subr.mxu0 0.0
        %909 = vmatpush1.msra.mxu0 0.0
        %910 = vmatprep.subr.mxu0 0.0
        %911 = vmatpush1.msra.mxu0 0.0
        %912 = vmatprep.subr.mxu0 0.0
        %913 = vmatpush1.msra.mxu0 0.0
        %914 = vmatprep.subr.mxu0 0.0
        %915 = vmatpush1.msra.mxu0 0.0
        %916 = vmatprep.subr.mxu0 0.0
        %917 = vmatpush1.msra.mxu0 0.0
        %918 = vmatprep.subr.mxu0 0.0
        %919 = vmatpush1.msra.mxu0 0.0
        %920 = vmatprep.subr.mxu0 0.0
        %921 = vmatpush1.msra.mxu0 0.0
        %922 = vmatprep.subr.mxu0 0.0
        %923 = vmatpush1.msra.mxu0 0.0
        %924 = vmatprep.subr.mxu0 0.0
        %925 = vmatpush1.msra.mxu0 0.0
        %926 = vmatprep.subr.mxu0 0.0
        %927 = vmatpush1.msra.mxu0 0.0
        %928 = vmatprep.subr.mxu0 0.0
        %929 = vmatpush1.msra.mxu0 0.0
        %930 = vmatprep.subr.mxu0 0.0
        %931 = vmatpush1.msra.mxu0 0.0
        %932 = vmatprep.subr.mxu0 0.0
        %933 = vmatpush1.msra.mxu0 0.0
        %934 = vmatprep.subr.mxu0 0.0
        %935 = vmatpush1.msra.mxu0 0.0
        %936 = vmatprep.subr.mxu0 0.0
        %937 = vmatpush1.msra.mxu0 0.0
        %938 = vmatprep.subr.mxu0 0.0
        %939 = vmatpush1.msra.mxu0 0.0
        %940 = vmatprep.subr.mxu0 0.0
        %941 = vmatpush1.msra.mxu0 0.0
        %942 = vmatprep.subr.mxu0 0.0
        %943 = vmatpush1.msra.mxu0 0.0
        %944 = vmatprep.subr.mxu0 0.0
        %945 = vmatpush1.msra.mxu0 0.0
        %946 = vmatprep.subr.mxu0 0.0
        %947 = vmatpush1.msra.mxu0 0.0
        %948 = vmatprep.subr.mxu0 0.0
        %949 = vmatpush1.msra.mxu0 0.0
        %950 = vmatprep.subr.mxu0 0.0
        %951 = vmatpush1.msra.mxu0 0.0
        %952 = vmatprep.subr.mxu0 0.0
        %953 = vmatpush1.msra.mxu0 0.0
        %954 = vmatprep.subr.mxu0 0.0
        %955 = vmatpush1.msra.mxu0 0.0
        %956 = vmatprep.subr.mxu0 0.0
        %957 = vmatpush1.msra.mxu0 0.0
        %958 = vmatprep.subr.mxu0 0.0
        %959 = vmatpush1.msra.mxu0 0.0
        %960 = vmatprep.subr.mxu0 0.0
        %961 = vmatpush1.msra.mxu0 0.0
        %962 = vmatprep.subr.mxu0 0.0
        %963 = vmatpush1.msra.mxu0 0.0
        %964 = vmatprep.mubr.f32.mxu0 0.0
        %v965 = vand.u32 %v203, 4294901760
        %v966 = vsub.f32 %v203, %v965
        %v967 = vand.u32 %v966, 4294901760
        %968 = vmatmul.mubr.f32.gmra.mrb[0].mxu0 %v967
        %v969 = vpop.f32.mrb[0].mxu0
        %v970 = vadd.f32 %v895, %v969
        %v971 = vpop.f32.mrb[0].mxu0
        %972 = vdwg.mxu0
        %973 = vmatprep.subr.mxu0 0.0
        %v974 = vand.u32 %v194, 4294901760
        %v975 = vsub.f32 %v194, %v974
        %v976 = vand.u32 %v975, 4294901760
        %977 = vmatpush1.msra.mxu0 %v976
        %978 = vmatprep.subr.mxu0 0.0
        %v979 = vand.u32 %v195, 4294901760
        %v980 = vsub.f32 %v195, %v979
        %v981 = vand.u32 %v980, 4294901760
        %982 = vmatpush1.msra.mxu0 %v981
        %983 = vmatprep.subr.mxu0 0.0
        %984 = vmatpush1.msra.mxu0 0.0
        %985 = vmatprep.subr.mxu0 0.0
        %986 = vmatpush1.msra.mxu0 0.0
        %987 = vmatprep.subr.mxu0 0.0
        %988 = vmatpush1.msra.mxu0 0.0
        %989 = vmatprep.subr.mxu0 0.0
        %990 = vmatpush1.msra.mxu0 0.0
        %991 = vmatprep.subr.mxu0 0.0
        %992 = vmatpush1.msra.mxu0 0.0
        %993 = vmatprep.subr.mxu0 0.0
        %994 = vmatpush1.msra.mxu0 0.0
        %995 = vmatprep.subr.mxu0 0.0
        %996 = vmatpush1.msra.mxu0 0.0
        %997 = vmatprep.subr.mxu0 0.0
        %998 = vmatpush1.msra.mxu0 0.0
        %999 = vmatprep.subr.mxu0 0.0
        %1000 = vmatpush1.msra.mxu0 0.0
        %1001 = vmatprep.subr.mxu0 0.0
        %1002 = vmatpush1.msra.mxu0 0.0
        %1003 = vmatprep.subr.mxu0 0.0
        %1004 = vmatpush1.msra.mxu0 0.0
        %1005 = vmatprep.subr.mxu0 0.0
        %1006 = vmatpush1.msra.mxu0 0.0
        %1007 = vmatprep.subr.mxu0 0.0
        %1008 = vmatpush1.msra.mxu0 0.0
        %1009 = vmatprep.subr.mxu0 0.0
        %1010 = vmatpush1.msra.mxu0 0.0
        %1011 = vmatprep.subr.mxu0 0.0
        %1012 = vmatpush1.msra.mxu0 0.0
        %1013 = vmatprep.subr.mxu0 0.0
        %1014 = vmatpush1.msra.mxu0 0.0
        %1015 = vmatprep.subr.mxu0 0.0
        %1016 = vmatpush1.msra.mxu0 0.0
        %1017 = vmatprep.subr.mxu0 0.0
        %1018 = vmatpush1.msra.mxu0 0.0
        %1019 = vmatprep.subr.mxu0 0.0
        %1020 = vmatpush1.msra.mxu0 0.0
        %1021 = vmatprep.subr.mxu0 0.0
        %1022 = vmatpush1.msra.mxu0 0.0
        %1023 = vmatprep.subr.mxu0 0.0
        %1024 = vmatpush1.msra.mxu0 0.0
        %1025 = vmatprep.subr.mxu0 0.0
        %1026 = vmatpush1.msra.mxu0 0.0
        %1027 = vmatprep.subr.mxu0 0.0
        %1028 = vmatpush1.msra.mxu0 0.0
        %1029 = vmatprep.subr.mxu0 0.0
        %1030 = vmatpush1.msra.mxu0 0.0
        %1031 = vmatprep.subr.mxu0 0.0
        %1032 = vmatpush1.msra.mxu0 0.0
        %1033 = vmatprep.subr.mxu0 0.0
        %1034 = vmatpush1.msra.mxu0 0.0
        %1035 = vmatprep.subr.mxu0 0.0
        %1036 = vmatpush1.msra.mxu0 0.0
        %1037 = vmatprep.subr.mxu0 0.0
        %1038 = vmatpush1.msra.mxu0 0.0
        %1039 = vmatprep.subr.mxu0 0.0
        %1040 = vmatpush1.msra.mxu0 0.0
        %1041 = vmatprep.subr.mxu0 0.0
        %1042 = vmatpush1.msra.mxu0 0.0
        %1043 = vmatprep.mubr.f32.mxu0 0.0
        %v1044 = vand.u32 %v203, 4294901760
        %1045 = vmatmul.mubr.f32.gmra.mrb[0].mxu0 %v1044
        %v1046 = vpop.f32.mrb[0].mxu0
        %v1047 = vadd.f32 %v970, %v1046
        %v1048 = vpop.f32.mrb[0].mxu0
        %1049 = vdwg.mxu0
        %1050 = vmatprep.subr.mxu0 0.0
        %v1051 = vand.u32 %v194, 4294901760
        %1052 = vmatpush1.msra.mxu0 %v1051
        %1053 = vmatprep.subr.mxu0 0.0
        %v1054 = vand.u32 %v195, 4294901760
        %1055 = vmatpush1.msra.mxu0 %v1054
        %1056 = vmatprep.subr.mxu0 0.0
        %1057 = vmatpush1.msra.mxu0 0.0
        %1058 = vmatprep.subr.mxu0 0.0
        %1059 = vmatpush1.msra.mxu0 0.0
        %1060 = vmatprep.subr.mxu0 0.0
        %1061 = vmatpush1.msra.mxu0 0.0
        %1062 = vmatprep.subr.mxu0 0.0
        %1063 = vmatpush1.msra.mxu0 0.0
        %1064 = vmatprep.subr.mxu0 0.0
        %1065 = vmatpush1.msra.mxu0 0.0
        %1066 = vmatprep.subr.mxu0 0.0
        %1067 = vmatpush1.msra.mxu0 0.0
        %1068 = vmatprep.subr.mxu0 0.0
        %1069 = vmatpush1.msra.mxu0 0.0
        %1070 = vmatprep.subr.mxu0 0.0
        %1071 = vmatpush1.msra.mxu0 0.0
        %1072 = vmatprep.subr.mxu0 0.0
        %1073 = vmatpush1.msra.mxu0 0.0
        %1074 = vmatprep.subr.mxu0 0.0
        %1075 = vmatpush1.msra.mxu0 0.0
        %1076 = vmatprep.subr.mxu0 0.0
        %1077 = vmatpush1.msra.mxu0 0.0
        %1078 = vmatprep.subr.mxu0 0.0
        %1079 = vmatpush1.msra.mxu0 0.0
        %1080 = vmatprep.subr.mxu0 0.0
        %1081 = vmatpush1.msra.mxu0 0.0
        %1082 = vmatprep.subr.mxu0 0.0
        %1083 = vmatpush1.msra.mxu0 0.0
        %1084 = vmatprep.subr.mxu0 0.0
        %1085 = vmatpush1.msra.mxu0 0.0
        %1086 = vmatprep.subr.mxu0 0.0
        %1087 = vmatpush1.msra.mxu0 0.0
        %1088 = vmatprep.subr.mxu0 0.0
        %1089 = vmatpush1.msra.mxu0 0.0
        %1090 = vmatprep.subr.mxu0 0.0
        %1091 = vmatpush1.msra.mxu0 0.0
        %1092 = vmatprep.subr.mxu0 0.0
        %1093 = vmatpush1.msra.mxu0 0.0
        %1094 = vmatprep.subr.mxu0 0.0
        %1095 = vmatpush1.msra.mxu0 0.0
        %1096 = vmatprep.subr.mxu0 0.0
        %1097 = vmatpush1.msra.mxu0 0.0
        %1098 = vmatprep.subr.mxu0 0.0
        %1099 = vmatpush1.msra.mxu0 0.0
        %1100 = vmatprep.subr.mxu0 0.0
        %1101 = vmatpush1.msra.mxu0 0.0
        %1102 = vmatprep.subr.mxu0 0.0
        %1103 = vmatpush1.msra.mxu0 0.0
        %1104 = vmatprep.subr.mxu0 0.0
        %1105 = vmatpush1.msra.mxu0 0.0
        %1106 = vmatprep.subr.mxu0 0.0
        %1107 = vmatpush1.msra.mxu0 0.0
        %1108 = vmatprep.subr.mxu0 0.0
        %1109 = vmatpush1.msra.mxu0 0.0
        %1110 = vmatprep.subr.mxu0 0.0
        %1111 = vmatpush1.msra.mxu0 0.0
        %1112 = vmatprep.subr.mxu0 0.0
        %1113 = vmatpush1.msra.mxu0 0.0
        %1114 = vmatprep.subr.mxu0 0.0
        %1115 = vmatpush1.msra.mxu0 0.0
        %1116 = vmatprep.mubr.f32.mxu0 0.0
        %v1117 = vand.u32 %v203, 4294901760
        %1118 = vmatmul.mubr.f32.gmra.mrb[0].mxu0 %v1117
        %v1119 = vpop.f32.mrb[0].mxu0
        %v1120 = vadd.f32 %v1047, %v1119
        %v1121 = vpop.f32.mrb[0].mxu0
        %1122 = vdwg.mxu0
        %1123 = vmatprep.subr.mxu0 0.0
        %v1124 = vand.u32 %v196, 4294901760
        %1125 = vmatpush1.msra.mxu0 %v1124
        %1126 = vmatprep.subr.mxu0 0.0
        %v1127 = vand.u32 %v197, 4294901760
        %1128 = vmatpush1.msra.mxu0 %v1127
        %1129 = vmatprep.subr.mxu0 0.0
        %1130 = vmatpush1.msra.mxu0 0.0
        %1131 = vmatprep.subr.mxu0 0.0
        %1132 = vmatpush1.msra.mxu0 0.0
        %1133 = vmatprep.subr.mxu0 0.0
        %1134 = vmatpush1.msra.mxu0 0.0
        %1135 = vmatprep.subr.mxu0 0.0
        %1136 = vmatpush1.msra.mxu0 0.0
        %1137 = vmatprep.subr.mxu0 0.0
        %1138 = vmatpush1.msra.mxu0 0.0
        %1139 = vmatprep.subr.mxu0 0.0
        %1140 = vmatpush1.msra.mxu0 0.0
        %1141 = vmatprep.subr.mxu0 0.0
        %1142 = vmatpush1.msra.mxu0 0.0
        %1143 = vmatprep.subr.mxu0 0.0
        %1144 = vmatpush1.msra.mxu0 0.0
        %1145 = vmatprep.subr.mxu0 0.0
        %1146 = vmatpush1.msra.mxu0 0.0
        %1147 = vmatprep.subr.mxu0 0.0
        %1148 = vmatpush1.msra.mxu0 0.0
        %1149 = vmatprep.subr.mxu0 0.0
        %1150 = vmatpush1.msra.mxu0 0.0
        %1151 = vmatprep.subr.mxu0 0.0
        %1152 = vmatpush1.msra.mxu0 0.0
        %1153 = vmatprep.subr.mxu0 0.0
        %1154 = vmatpush1.msra.mxu0 0.0
        %1155 = vmatprep.subr.mxu0 0.0
        %1156 = vmatpush1.msra.mxu0 0.0
        %1157 = vmatprep.subr.mxu0 0.0
        %1158 = vmatpush1.msra.mxu0 0.0
        %1159 = vmatprep.subr.mxu0 0.0
        %1160 = vmatpush1.msra.mxu0 0.0
        %1161 = vmatprep.subr.mxu0 0.0
        %1162 = vmatpush1.msra.mxu0 0.0
        %1163 = vmatprep.subr.mxu0 0.0
        %1164 = vmatpush1.msra.mxu0 0.0
        %1165 = vmatprep.subr.mxu0 0.0
        %1166 = vmatpush1.msra.mxu0 0.0
        %1167 = vmatprep.subr.mxu0 0.0
        %1168 = vmatpush1.msra.mxu0 0.0
        %1169 = vmatprep.subr.mxu0 0.0
        %1170 = vmatpush1.msra.mxu0 0.0
        %1171 = vmatprep.subr.mxu0 0.0
        %1172 = vmatpush1.msra.mxu0 0.0
        %1173 = vmatprep.subr.mxu0 0.0
        %1174 = vmatpush1.msra.mxu0 0.0
        %1175 = vmatprep.subr.mxu0 0.0
        %1176 = vmatpush1.msra.mxu0 0.0
        %1177 = vmatprep.subr.mxu0 0.0
        %1178 = vmatpush1.msra.mxu0 0.0
        %1179 = vmatprep.subr.mxu0 0.0
        %1180 = vmatpush1.msra.mxu0 0.0
        %1181 = vmatprep.subr.mxu0 0.0
        %1182 = vmatpush1.msra.mxu0 0.0
        %1183 = vmatprep.subr.mxu0 0.0
        %1184 = vmatpush1.msra.mxu0 0.0
        %1185 = vmatprep.subr.mxu0 0.0
        %1186 = vmatpush1.msra.mxu0 0.0
        %1187 = vmatprep.subr.mxu0 0.0
        %1188 = vmatpush1.msra.mxu0 0.0
        %1189 = vmatprep.mubr.f32.mxu0 0.0
        %v1190 = vand.u32 %v203, 4294901760
        %v1191 = vsub.f32 %v203, %v1190
        %v1192 = vand.u32 %v1191, 4294901760
        %v1193 = vsub.f32 %v1191, %v1192
        %v1194 = vand.u32 %v1193, 4294901760
        %1195 = vmatmul.mubr.f32.gmra.mrb[0].mxu0 %v1194
        %v1196 = vpop.f32.mrb[0].mxu0
        %v1197 = vadd.f32 0.0, %v1196
        %v1198 = vpop.f32.mrb[0].mxu0
        %1199 = vdwg.mxu0
        %1200 = vmatprep.subr.mxu0 0.0
        %v1201 = vand.u32 %v196, 4294901760
        %v1202 = vsub.f32 %v196, %v1201
        %v1203 = vand.u32 %v1202, 4294901760
        %v1204 = vsub.f32 %v1202, %v1203
        %v1205 = vand.u32 %v1204, 4294901760
        %1206 = vmatpush1.msra.mxu0 %v1205
        %1207 = vmatprep.subr.mxu0 0.0
        %v1208 = vand.u32 %v197, 4294901760
        %v1209 = vsub.f32 %v197, %v1208
        %v1210 = vand.u32 %v1209, 4294901760
        %v1211 = vsub.f32 %v1209, %v1210
        %v1212 = vand.u32 %v1211, 4294901760
        %1213 = vmatpush1.msra.mxu0 %v1212
        %1214 = vmatprep.subr.mxu0 0.0
        %1215 = vmatpush1.msra.mxu0 0.0
        %1216 = vmatprep.subr.mxu0 0.0
        %1217 = vmatpush1.msra.mxu0 0.0
        %1218 = vmatprep.subr.mxu0 0.0
        %1219 = vmatpush1.msra.mxu0 0.0
        %1220 = vmatprep.subr.mxu0 0.0
        %1221 = vmatpush1.msra.mxu0 0.0
        %1222 = vmatprep.subr.mxu0 0.0
        %1223 = vmatpush1.msra.mxu0 0.0
        %1224 = vmatprep.subr.mxu0 0.0
        %1225 = vmatpush1.msra.mxu0 0.0
        %1226 = vmatprep.subr.mxu0 0.0
        %1227 = vmatpush1.msra.mxu0 0.0
        %1228 = vmatprep.subr.mxu0 0.0
        %1229 = vmatpush1.msra.mxu0 0.0
        %1230 = vmatprep.subr.mxu0 0.0
        %1231 = vmatpush1.msra.mxu0 0.0
        %1232 = vmatprep.subr.mxu0 0.0
        %1233 = vmatpush1.msra.mxu0 0.0
        %1234 = vmatprep.subr.mxu0 0.0
        %1235 = vmatpush1.msra.mxu0 0.0
        %1236 = vmatprep.subr.mxu0 0.0
        %1237 = vmatpush1.msra.mxu0 0.0
        %1238 = vmatprep.subr.mxu0 0.0
        %1239 = vmatpush1.msra.mxu0 0.0
        %1240 = vmatprep.subr.mxu0 0.0
        %1241 = vmatpush1.msra.mxu0 0.0
        %1242 = vmatprep.subr.mxu0 0.0
        %1243 = vmatpush1.msra.mxu0 0.0
        %1244 = vmatprep.subr.mxu0 0.0
        %1245 = vmatpush1.msra.mxu0 0.0
        %1246 = vmatprep.subr.mxu0 0.0
        %1247 = vmatpush1.msra.mxu0 0.0
        %1248 = vmatprep.subr.mxu0 0.0
        %1249 = vmatpush1.msra.mxu0 0.0
        %1250 = vmatprep.subr.mxu0 0.0
        %1251 = vmatpush1.msra.mxu0 0.0
        %1252 = vmatprep.subr.mxu0 0.0
        %1253 = vmatpush1.msra.mxu0 0.0
        %1254 = vmatprep.subr.mxu0 0.0
        %1255 = vmatpush1.msra.mxu0 0.0
        %1256 = vmatprep.subr.mxu0 0.0
        %1257 = vmatpush1.msra.mxu0 0.0
        %1258 = vmatprep.subr.mxu0 0.0
        %1259 = vmatpush1.msra.mxu0 0.0
        %1260 = vmatprep.subr.mxu0 0.0
        %1261 = vmatpush1.msra.mxu0 0.0
        %1262 = vmatprep.subr.mxu0 0.0
        %1263 = vmatpush1.msra.mxu0 0.0
        %1264 = vmatprep.subr.mxu0 0.0
        %1265 = vmatpush1.msra.mxu0 0.0
        %1266 = vmatprep.subr.mxu0 0.0
        %1267 = vmatpush1.msra.mxu0 0.0
        %1268 = vmatprep.subr.mxu0 0.0
        %1269 = vmatpush1.msra.mxu0 0.0
        %1270 = vmatprep.subr.mxu0 0.0
        %1271 = vmatpush1.msra.mxu0 0.0
        %1272 = vmatprep.subr.mxu0 0.0
        %1273 = vmatpush1.msra.mxu0 0.0
        %1274 = vmatprep.mubr.f32.mxu0 0.0
        %v1275 = vand.u32 %v203, 4294901760
        %1276 = vmatmul.mubr.f32.gmra.mrb[0].mxu0 %v1275
        %v1277 = vpop.f32.mrb[0].mxu0
        %v1278 = vadd.f32 %v1197, %v1277
        %v1279 = vpop.f32.mrb[0].mxu0
        %1280 = vdwg.mxu0
        %1281 = vmatprep.subr.mxu0 0.0
        %v1282 = vand.u32 %v196, 4294901760
        %v1283 = vsub.f32 %v196, %v1282
        %1284 = vmatpush1.msra.mxu0 %v1283
        %1285 = vmatprep.subr.mxu0 0.0
        %v1286 = vand.u32 %v197, 4294901760
        %v1287 = vsub.f32 %v197, %v1286
        %1288 = vmatpush1.msra.mxu0 %v1287
        %1289 = vmatprep.subr.mxu0 0.0
        %1290 = vmatpush1.msra.mxu0 0.0
        %1291 = vmatprep.subr.mxu0 0.0
        %1292 = vmatpush1.msra.mxu0 0.0
        %1293 = vmatprep.subr.mxu0 0.0
        %1294 = vmatpush1.msra.mxu0 0.0
        %1295 = vmatprep.subr.mxu0 0.0
        %1296 = vmatpush1.msra.mxu0 0.0
        %1297 = vmatprep.subr.mxu0 0.0
        %1298 = vmatpush1.msra.mxu0 0.0
        %1299 = vmatprep.subr.mxu0 0.0
        %1300 = vmatpush1.msra.mxu0 0.0
        %1301 = vmatprep.subr.mxu0 0.0
        %1302 = vmatpush1.msra.mxu0 0.0
        %1303 = vmatprep.subr.mxu0 0.0
        %1304 = vmatpush1.msra.mxu0 0.0
        %1305 = vmatprep.subr.mxu0 0.0
        %1306 = vmatpush1.msra.mxu0 0.0
        %1307 = vmatprep.subr.mxu0 0.0
        %1308 = vmatpush1.msra.mxu0 0.0
        %1309 = vmatprep.subr.mxu0 0.0
        %1310 = vmatpush1.msra.mxu0 0.0
        %1311 = vmatprep.subr.mxu0 0.0
        %1312 = vmatpush1.msra.mxu0 0.0
        %1313 = vmatprep.subr.mxu0 0.0
        %1314 = vmatpush1.msra.mxu0 0.0
        %1315 = vmatprep.subr.mxu0 0.0
        %1316 = vmatpush1.msra.mxu0 0.0
        %1317 = vmatprep.subr.mxu0 0.0
        %1318 = vmatpush1.msra.mxu0 0.0
        %1319 = vmatprep.subr.mxu0 0.0
        %1320 = vmatpush1.msra.mxu0 0.0
        %1321 = vmatprep.subr.mxu0 0.0
        %1322 = vmatpush1.msra.mxu0 0.0
        %1323 = vmatprep.subr.mxu0 0.0
        %1324 = vmatpush1.msra.mxu0 0.0
        %1325 = vmatprep.subr.mxu0 0.0
        %1326 = vmatpush1.msra.mxu0 0.0
        %1327 = vmatprep.subr.mxu0 0.0
        %1328 = vmatpush1.msra.mxu0 0.0
        %1329 = vmatprep.subr.mxu0 0.0
        %1330 = vmatpush1.msra.mxu0 0.0
        %1331 = vmatprep.subr.mxu0 0.0
        %1332 = vmatpush1.msra.mxu0 0.0
        %1333 = vmatprep.subr.mxu0 0.0
        %1334 = vmatpush1.msra.mxu0 0.0
        %1335 = vmatprep.subr.mxu0 0.0
        %1336 = vmatpush1.msra.mxu0 0.0
        %1337 = vmatprep.subr.mxu0 0.0
        %1338 = vmatpush1.msra.mxu0 0.0
        %1339 = vmatprep.subr.mxu0 0.0
        %1340 = vmatpush1.msra.mxu0 0.0
        %1341 = vmatprep.subr.mxu0 0.0
        %1342 = vmatpush1.msra.mxu0 0.0
        %1343 = vmatprep.subr.mxu0 0.0
        %1344 = vmatpush1.msra.mxu0 0.0
        %1345 = vmatprep.subr.mxu0 0.0
        %1346 = vmatpush1.msra.mxu0 0.0
        %1347 = vmatprep.subr.mxu0 0.0
        %1348 = vmatpush1.msra.mxu0 0.0
        %1349 = vmatprep.mubr.f32.mxu0 0.0
        %v1350 = vand.u32 %v203, 4294901760
        %v1351 = vsub.f32 %v203, %v1350
        %1352 = vmatmul.mubr.f32.gmra.mrb[0].mxu0 %v1351
        %v1353 = vpop.f32.mrb[0].mxu0
        %v1354 = vadd.f32 %v1278, %v1353
        %v1355 = vpop.f32.mrb[0].mxu0
        %1356 = vdwg.mxu0
        %1357 = vmatprep.subr.mxu0 0.0
        %v1358 = vand.u32 %v196, 4294901760
        %1359 = vmatpush1.msra.mxu0 %v1358
        %1360 = vmatprep.subr.mxu0 0.0
        %v1361 = vand.u32 %v197, 4294901760
        %1362 = vmatpush1.msra.mxu0 %v1361
        %1363 = vmatprep.subr.mxu0 0.0
        %1364 = vmatpush1.msra.mxu0 0.0
        %1365 = vmatprep.subr.mxu0 0.0
        %1366 = vmatpush1.msra.mxu0 0.0
        %1367 = vmatprep.subr.mxu0 0.0
        %1368 = vmatpush1.msra.mxu0 0.0
        %1369 = vmatprep.subr.mxu0 0.0
        %1370 = vmatpush1.msra.mxu0 0.0
        %1371 = vmatprep.subr.mxu0 0.0
        %1372 = vmatpush1.msra.mxu0 0.0
        %1373 = vmatprep.subr.mxu0 0.0
        %1374 = vmatpush1.msra.mxu0 0.0
        %1375 = vmatprep.subr.mxu0 0.0
        %1376 = vmatpush1.msra.mxu0 0.0
        %1377 = vmatprep.subr.mxu0 0.0
        %1378 = vmatpush1.msra.mxu0 0.0
        %1379 = vmatprep.subr.mxu0 0.0
        %1380 = vmatpush1.msra.mxu0 0.0
        %1381 = vmatprep.subr.mxu0 0.0
        %1382 = vmatpush1.msra.mxu0 0.0
        %1383 = vmatprep.subr.mxu0 0.0
        %1384 = vmatpush1.msra.mxu0 0.0
        %1385 = vmatprep.subr.mxu0 0.0
        %1386 = vmatpush1.msra.mxu0 0.0
        %1387 = vmatprep.subr.mxu0 0.0
        %1388 = vmatpush1.msra.mxu0 0.0
        %1389 = vmatprep.subr.mxu0 0.0
        %1390 = vmatpush1.msra.mxu0 0.0
        %1391 = vmatprep.subr.mxu0 0.0
        %1392 = vmatpush1.msra.mxu0 0.0
        %1393 = vmatprep.subr.mxu0 0.0
        %1394 = vmatpush1.msra.mxu0 0.0
        %1395 = vmatprep.subr.mxu0 0.0
        %1396 = vmatpush1.msra.mxu0 0.0
        %1397 = vmatprep.subr.mxu0 0.0
        %1398 = vmatpush1.msra.mxu0 0.0
        %1399 = vmatprep.subr.mxu0 0.0
        %1400 = vmatpush1.msra.mxu0 0.0
        %1401 = vmatprep.subr.mxu0 0.0
        %1402 = vmatpush1.msra.mxu0 0.0
        %1403 = vmatprep.subr.mxu0 0.0
        %1404 = vmatpush1.msra.mxu0 0.0
        %1405 = vmatprep.subr.mxu0 0.0
        %1406 = vmatpush1.msra.mxu0 0.0
        %1407 = vmatprep.subr.mxu0 0.0
        %1408 = vmatpush1.msra.mxu0 0.0
        %1409 = vmatprep.subr.mxu0 0.0
        %1410 = vmatpush1.msra.mxu0 0.0
        %1411 = vmatprep.subr.mxu0 0.0
        %1412 = vmatpush1.msra.mxu0 0.0
        %1413 = vmatprep.subr.mxu0 0.0
        %1414 = vmatpush1.msra.mxu0 0.0
        %1415 = vmatprep.subr.mxu0 0.0
        %1416 = vmatpush1.msra.mxu0 0.0
        %1417 = vmatprep.subr.mxu0 0.0
        %1418 = vmatpush1.msra.mxu0 0.0
        %1419 = vmatprep.subr.mxu0 0.0
        %1420 = vmatpush1.msra.mxu0 0.0
        %1421 = vmatprep.subr.mxu0 0.0
        %1422 = vmatpush1.msra.mxu0 0.0
        %1423 = vmatprep.mubr.f32.mxu0 0.0
        %v1424 = vand.u32 %v203, 4294901760
        %v1425 = vsub.f32 %v203, %v1424
        %v1426 = vand.u32 %v1425, 4294901760
        %1427 = vmatmul.mubr.f32.gmra.mrb[0].mxu0 %v1426
        %v1428 = vpop.f32.mrb[0].mxu0
        %v1429 = vadd.f32 %v1354, %v1428
        %v1430 = vpop.f32.mrb[0].mxu0
        %1431 = vdwg.mxu0
        %1432 = vmatprep.subr.mxu0 0.0
        %v1433 = vand.u32 %v196, 4294901760
        %v1434 = vsub.f32 %v196, %v1433
        %v1435 = vand.u32 %v1434, 4294901760
        %1436 = vmatpush1.msra.mxu0 %v1435
        %1437 = vmatprep.subr.mxu0 0.0
        %v1438 = vand.u32 %v197, 4294901760
        %v1439 = vsub.f32 %v197, %v1438
        %v1440 = vand.u32 %v1439, 4294901760
        %1441 = vmatpush1.msra.mxu0 %v1440
        %1442 = vmatprep.subr.mxu0 0.0
        %1443 = vmatpush1.msra.mxu0 0.0
        %1444 = vmatprep.subr.mxu0 0.0
        %1445 = vmatpush1.msra.mxu0 0.0
        %1446 = vmatprep.subr.mxu0 0.0
        %1447 = vmatpush1.msra.mxu0 0.0
        %1448 = vmatprep.subr.mxu0 0.0
        %1449 = vmatpush1.msra.mxu0 0.0
        %1450 = vmatprep.subr.mxu0 0.0
        %1451 = vmatpush1.msra.mxu0 0.0
        %1452 = vmatprep.subr.mxu0 0.0
        %1453 = vmatpush1.msra.mxu0 0.0
        %1454 = vmatprep.subr.mxu0 0.0
        %1455 = vmatpush1.msra.mxu0 0.0
        %1456 = vmatprep.subr.mxu0 0.0
        %1457 = vmatpush1.msra.mxu0 0.0
        %1458 = vmatprep.subr.mxu0 0.0
        %1459 = vmatpush1.msra.mxu0 0.0
        %1460 = vmatprep.subr.mxu0 0.0
        %1461 = vmatpush1.msra.mxu0 0.0
        %1462 = vmatprep.subr.mxu0 0.0
        %1463 = vmatpush1.msra.mxu0 0.0
        %1464 = vmatprep.subr.mxu0 0.0
        %1465 = vmatpush1.msra.mxu0 0.0
        %1466 = vmatprep.subr.mxu0 0.0
        %1467 = vmatpush1.msra.mxu0 0.0
        %1468 = vmatprep.subr.mxu0 0.0
        %1469 = vmatpush1.msra.mxu0 0.0
        %1470 = vmatprep.subr.mxu0 0.0
        %1471 = vmatpush1.msra.mxu0 0.0
        %1472 = vmatprep.subr.mxu0 0.0
        %1473 = vmatpush1.msra.mxu0 0.0
        %1474 = vmatprep.subr.mxu0 0.0
        %1475 = vmatpush1.msra.mxu0 0.0
        %1476 = vmatprep.subr.mxu0 0.0
        %1477 = vmatpush1.msra.mxu0 0.0
        %1478 = vmatprep.subr.mxu0 0.0
        %1479 = vmatpush1.msra.mxu0 0.0
        %1480 = vmatprep.subr.mxu0 0.0
        %1481 = vmatpush1.msra.mxu0 0.0
        %1482 = vmatprep.subr.mxu0 0.0
        %1483 = vmatpush1.msra.mxu0 0.0
        %1484 = vmatprep.subr.mxu0 0.0
        %1485 = vmatpush1.msra.mxu0 0.0
        %1486 = vmatprep.subr.mxu0 0.0
        %1487 = vmatpush1.msra.mxu0 0.0
        %1488 = vmatprep.subr.mxu0 0.0
        %1489 = vmatpush1.msra.mxu0 0.0
        %1490 = vmatprep.subr.mxu0 0.0
        %1491 = vmatpush1.msra.mxu0 0.0
        %1492 = vmatprep.subr.mxu0 0.0
        %1493 = vmatpush1.msra.mxu0 0.0
        %1494 = vmatprep.subr.mxu0 0.0
        %1495 = vmatpush1.msra.mxu0 0.0
        %1496 = vmatprep.subr.mxu0 0.0
        %1497 = vmatpush1.msra.mxu0 0.0
        %1498 = vmatprep.subr.mxu0 0.0
        %1499 = vmatpush1.msra.mxu0 0.0
        %1500 = vmatprep.subr.mxu0 0.0
        %1501 = vmatpush1.msra.mxu0 0.0
        %1502 = vmatprep.mubr.f32.mxu0 0.0
        %v1503 = vand.u32 %v203, 4294901760
        %1504 = vmatmul.mubr.f32.gmra.mrb[0].mxu0 %v1503
        %v1505 = vpop.f32.mrb[0].mxu0
        %v1506 = vadd.f32 %v1429, %v1505
        %v1507 = vpop.f32.mrb[0].mxu0
        %1508 = vdwg.mxu0
        %1509 = vmatprep.subr.mxu0 0.0
        %v1510 = vand.u32 %v196, 4294901760
        %1511 = vmatpush1.msra.mxu0 %v1510
        %1512 = vmatprep.subr.mxu0 0.0
        %v1513 = vand.u32 %v197, 4294901760
        %1514 = vmatpush1.msra.mxu0 %v1513
        %1515 = vmatprep.subr.mxu0 0.0
        %1516 = vmatpush1.msra.mxu0 0.0
        %1517 = vmatprep.subr.mxu0 0.0
        %1518 = vmatpush1.msra.mxu0 0.0
        %1519 = vmatprep.subr.mxu0 0.0
        %1520 = vmatpush1.msra.mxu0 0.0
        %1521 = vmatprep.subr.mxu0 0.0
        %1522 = vmatpush1.msra.mxu0 0.0
        %1523 = vmatprep.subr.mxu0 0.0
        %1524 = vmatpush1.msra.mxu0 0.0
        %1525 = vmatprep.subr.mxu0 0.0
        %1526 = vmatpush1.msra.mxu0 0.0
        %1527 = vmatprep.subr.mxu0 0.0
        %1528 = vmatpush1.msra.mxu0 0.0
        %1529 = vmatprep.subr.mxu0 0.0
        %1530 = vmatpush1.msra.mxu0 0.0
        %1531 = vmatprep.subr.mxu0 0.0
        %1532 = vmatpush1.msra.mxu0 0.0
        %1533 = vmatprep.subr.mxu0 0.0
        %1534 = vmatpush1.msra.mxu0 0.0
        %1535 = vmatprep.subr.mxu0 0.0
        %1536 = vmatpush1.msra.mxu0 0.0
        %1537 = vmatprep.subr.mxu0 0.0
        %1538 = vmatpush1.msra.mxu0 0.0
        %1539 = vmatprep.subr.mxu0 0.0
        %1540 = vmatpush1.msra.mxu0 0.0
        %1541 = vmatprep.subr.mxu0 0.0
        %1542 = vmatpush1.msra.mxu0 0.0
        %1543 = vmatprep.subr.mxu0 0.0
        %1544 = vmatpush1.msra.mxu0 0.0
        %1545 = vmatprep.subr.mxu0 0.0
        %1546 = vmatpush1.msra.mxu0 0.0
        %1547 = vmatprep.subr.mxu0 0.0
        %1548 = vmatpush1.msra.mxu0 0.0
        %1549 = vmatprep.subr.mxu0 0.0
        %1550 = vmatpush1.msra.mxu0 0.0
        %1551 = vmatprep.subr.mxu0 0.0
        %1552 = vmatpush1.msra.mxu0 0.0
        %1553 = vmatprep.subr.mxu0 0.0
        %1554 = vmatpush1.msra.mxu0 0.0
        %1555 = vmatprep.subr.mxu0 0.0
        %1556 = vmatpush1.msra.mxu0 0.0
        %1557 = vmatprep.subr.mxu0 0.0
        %1558 = vmatpush1.msra.mxu0 0.0
        %1559 = vmatprep.subr.mxu0 0.0
        %1560 = vmatpush1.msra.mxu0 0.0
        %1561 = vmatprep.subr.mxu0 0.0
        %1562 = vmatpush1.msra.mxu0 0.0
        %1563 = vmatprep.subr.mxu0 0.0
        %1564 = vmatpush1.msra.mxu0 0.0
        %1565 = vmatprep.subr.mxu0 0.0
        %1566 = vmatpush1.msra.mxu0 0.0
        %1567 = vmatprep.subr.mxu0 0.0
        %1568 = vmatpush1.msra.mxu0 0.0
        %1569 = vmatprep.subr.mxu0 0.0
        %1570 = vmatpush1.msra.mxu0 0.0
        %1571 = vmatprep.subr.mxu0 0.0
        %1572 = vmatpush1.msra.mxu0 0.0
        %1573 = vmatprep.subr.mxu0 0.0
        %1574 = vmatpush1.msra.mxu0 0.0
        %1575 = vmatprep.mubr.f32.mxu0 0.0
        %v1576 = vand.u32 %v203, 4294901760
        %1577 = vmatmul.mubr.f32.gmra.mrb[0].mxu0 %v1576
        %v1578 = vpop.f32.mrb[0].mxu0
        %v1579 = vadd.f32 %v1506, %v1578
        %v1580 = vpop.f32.mrb[0].mxu0
        %1581 = vdwg.mxu0
        %v1583 = vsel %vm201, %v661, 0
        %1585 = vmatprep.subr.mxu0 0.0
        %v1586 = vand.u32 %v199, 4294901760
        %1587 = vmatpush1.msra.mxu0 %v1586
        %1588 = vmatprep.subr.mxu0 0.0
        %v1589 = vand.u32 %v200, 4294901760
        %1590 = vmatpush1.msra.mxu0 %v1589
        %1591 = vmatprep.subr.mxu0 0.0
        %1592 = vmatpush1.msra.mxu0 0.0
        %1593 = vmatprep.subr.mxu0 0.0
        %1594 = vmatpush1.msra.mxu0 0.0
        %1595 = vmatprep.subr.mxu0 0.0
        %1596 = vmatpush1.msra.mxu0 0.0
        %1597 = vmatprep.subr.mxu0 0.0
        %1598 = vmatpush1.msra.mxu0 0.0
        %1599 = vmatprep.subr.mxu0 0.0
        %1600 = vmatpush1.msra.mxu0 0.0
        %1601 = vmatprep.subr.mxu0 0.0
        %1602 = vmatpush1.msra.mxu0 0.0
        %1603 = vmatprep.subr.mxu0 0.0
        %1604 = vmatpush1.msra.mxu0 0.0
        %1605 = vmatprep.subr.mxu0 0.0
        %1606 = vmatpush1.msra.mxu0 0.0
        %1607 = vmatprep.subr.mxu0 0.0
        %1608 = vmatpush1.msra.mxu0 0.0
        %1609 = vmatprep.subr.mxu0 0.0
        %1610 = vmatpush1.msra.mxu0 0.0
        %1611 = vmatprep.subr.mxu0 0.0
        %1612 = vmatpush1.msra.mxu0 0.0
        %1613 = vmatprep.subr.mxu0 0.0
        %1614 = vmatpush1.msra.mxu0 0.0
        %1615 = vmatprep.subr.mxu0 0.0
        %1616 = vmatpush1.msra.mxu0 0.0
        %1617 = vmatprep.subr.mxu0 0.0
        %1618 = vmatpush1.msra.mxu0 0.0
        %1619 = vmatprep.subr.mxu0 0.0
        %1620 = vmatpush1.msra.mxu0 0.0
        %1621 = vmatprep.subr.mxu0 0.0
        %1622 = vmatpush1.msra.mxu0 0.0
        %1623 = vmatprep.subr.mxu0 0.0
        %1624 = vmatpush1.msra.mxu0 0.0
        %1625 = vmatprep.subr.mxu0 0.0
        %1626 = vmatpush1.msra.mxu0 0.0
        %1627 = vmatprep.subr.mxu0 0.0
        %1628 = vmatpush1.msra.mxu0 0.0
        %1629 = vmatprep.subr.mxu0 0.0
        %1630 = vmatpush1.msra.mxu0 0.0
        %1631 = vmatprep.subr.mxu0 0.0
        %1632 = vmatpush1.msra.mxu0 0.0
        %1633 = vmatprep.subr.mxu0 0.0
        %1634 = vmatpush1.msra.mxu0 0.0
        %1635 = vmatprep.subr.mxu0 0.0
        %1636 = vmatpush1.msra.mxu0 0.0
        %1637 = vmatprep.subr.mxu0 0.0
        %1638 = vmatpush1.msra.mxu0 0.0
        %1639 = vmatprep.subr.mxu0 0.0
        %1640 = vmatpush1.msra.mxu0 0.0
        %1641 = vmatprep.subr.mxu0 0.0
        %1642 = vmatpush1.msra.mxu0 0.0
        %1643 = vmatprep.subr.mxu0 0.0
        %1644 = vmatpush1.msra.mxu0 0.0
        %1645 = vmatprep.subr.mxu0 0.0
        %1646 = vmatpush1.msra.mxu0 0.0
        %1647 = vmatprep.subr.mxu0 0.0
        %1648 = vmatpush1.msra.mxu0 0.0
        %1649 = vmatprep.subr.mxu0 0.0
        %1650 = vmatpush1.msra.mxu0 0.0
        %1651 = vmatprep.mubr.f32.mxu0 0.0
        %v1652 = vand.u32 %v1583, 4294901760
        %v1653 = vsub.f32 %v1583, %v1652
        %v1654 = vand.u32 %v1653, 4294901760
        %v1655 = vsub.f32 %v1653, %v1654
        %v1656 = vand.u32 %v1655, 4294901760
        %1657 = vmatmul.mubr.f32.gmra.mrb[0].mxu0 %v1656
        %v1658 = vpop.f32.mrb[0].mxu0
        %v1659 = vadd.f32 0.0, %v1658
        %v1660 = vpop.f32.mrb[0].mxu0
        %1661 = vdwg.mxu0
        %1662 = vmatprep.subr.mxu0 0.0
        %v1663 = vand.u32 %v199, 4294901760
        %v1664 = vsub.f32 %v199, %v1663
        %v1665 = vand.u32 %v1664, 4294901760
        %v1666 = vsub.f32 %v1664, %v1665
        %v1667 = vand.u32 %v1666, 4294901760
        %1668 = vmatpush1.msra.mxu0 %v1667
        %1669 = vmatprep.subr.mxu0 0.0
        %v1670 = vand.u32 %v200, 4294901760
        %v1671 = vsub.f32 %v200, %v1670
        %v1672 = vand.u32 %v1671, 4294901760
        %v1673 = vsub.f32 %v1671, %v1672
        %v1674 = vand.u32 %v1673, 4294901760
        %1675 = vmatpush1.msra.mxu0 %v1674
        %1676 = vmatprep.subr.mxu0 0.0
        %1677 = vmatpush1.msra.mxu0 0.0
        %1678 = vmatprep.subr.mxu0 0.0
        %1679 = vmatpush1.msra.mxu0 0.0
        %1680 = vmatprep.subr.mxu0 0.0
        %1681 = vmatpush1.msra.mxu0 0.0
        %1682 = vmatprep.subr.mxu0 0.0
        %1683 = vmatpush1.msra.mxu0 0.0
        %1684 = vmatprep.subr.mxu0 0.0
        %1685 = vmatpush1.msra.mxu0 0.0
        %1686 = vmatprep.subr.mxu0 0.0
        %1687 = vmatpush1.msra.mxu0 0.0
        %1688 = vmatprep.subr.mxu0 0.0
        %1689 = vmatpush1.msra.mxu0 0.0
        %1690 = vmatprep.subr.mxu0 0.0
        %1691 = vmatpush1.msra.mxu0 0.0
        %1692 = vmatprep.subr.mxu0 0.0
        %1693 = vmatpush1.msra.mxu0 0.0
        %1694 = vmatprep.subr.mxu0 0.0
        %1695 = vmatpush1.msra.mxu0 0.0
        %1696 = vmatprep.subr.mxu0 0.0
        %1697 = vmatpush1.msra.mxu0 0.0
        %1698 = vmatprep.subr.mxu0 0.0
        %1699 = vmatpush1.msra.mxu0 0.0
        %1700 = vmatprep.subr.mxu0 0.0
        %1701 = vmatpush1.msra.mxu0 0.0
        %1702 = vmatprep.subr.mxu0 0.0
        %1703 = vmatpush1.msra.mxu0 0.0
        %1704 = vmatprep.subr.mxu0 0.0
        %1705 = vmatpush1.msra.mxu0 0.0
        %1706 = vmatprep.subr.mxu0 0.0
        %1707 = vmatpush1.msra.mxu0 0.0
        %1708 = vmatprep.subr.mxu0 0.0
        %1709 = vmatpush1.msra.mxu0 0.0
        %1710 = vmatprep.subr.mxu0 0.0
        %1711 = vmatpush1.msra.mxu0 0.0
        %1712 = vmatprep.subr.mxu0 0.0
        %1713 = vmatpush1.msra.mxu0 0.0
        %1714 = vmatprep.subr.mxu0 0.0
        %1715 = vmatpush1.msra.mxu0 0.0
        %1716 = vmatprep.subr.mxu0 0.0
        %1717 = vmatpush1.msra.mxu0 0.0
        %1718 = vmatprep.subr.mxu0 0.0
        %1719 = vmatpush1.msra.mxu0 0.0
        %1720 = vmatprep.subr.mxu0 0.0
        %1721 = vmatpush1.msra.mxu0 0.0
        %1722 = vmatprep.subr.mxu0 0.0
        %1723 = vmatpush1.msra.mxu0 0.0
        %1724 = vmatprep.subr.mxu0 0.0
        %1725 = vmatpush1.msra.mxu0 0.0
        %1726 = vmatprep.subr.mxu0 0.0
        %1727 = vmatpush1.msra.mxu0 0.0
        %1728 = vmatprep.subr.mxu0 0.0
        %1729 = vmatpush1.msra.mxu0 0.0
        %1730 = vmatprep.subr.mxu0 0.0
        %1731 = vmatpush1.msra.mxu0 0.0
        %1732 = vmatprep.subr.mxu0 0.0
        %1733 = vmatpush1.msra.mxu0 0.0
        %1734 = vmatprep.subr.mxu0 0.0
        %1735 = vmatpush1.msra.mxu0 0.0
        %1736 = vmatprep.mubr.f32.mxu0 0.0
        %v1737 = vand.u32 %v1583, 4294901760
        %1738 = vmatmul.mubr.f32.gmra.mrb[0].mxu0 %v1737
        %v1739 = vpop.f32.mrb[0].mxu0
        %v1740 = vadd.f32 %v1659, %v1739
        %v1741 = vpop.f32.mrb[0].mxu0
        %1742 = vdwg.mxu0
        %1743 = vmatprep.subr.mxu0 0.0
        %v1744 = vand.u32 %v199, 4294901760
        %v1745 = vsub.f32 %v199, %v1744
        %1746 = vmatpush1.msra.mxu0 %v1745
        %1747 = vmatprep.subr.mxu0 0.0
        %v1748 = vand.u32 %v200, 4294901760
        %v1749 = vsub.f32 %v200, %v1748
        %1750 = vmatpush1.msra.mxu0 %v1749
        %1751 = vmatprep.subr.mxu0 0.0
        %1752 = vmatpush1.msra.mxu0 0.0
        %1753 = vmatprep.subr.mxu0 0.0
        %1754 = vmatpush1.msra.mxu0 0.0
        %1755 = vmatprep.subr.mxu0 0.0
        %1756 = vmatpush1.msra.mxu0 0.0
        %1757 = vmatprep.subr.mxu0 0.0
        %1758 = vmatpush1.msra.mxu0 0.0
        %1759 = vmatprep.subr.mxu0 0.0
        %1760 = vmatpush1.msra.mxu0 0.0
        %1761 = vmatprep.subr.mxu0 0.0
        %1762 = vmatpush1.msra.mxu0 0.0
        %1763 = vmatprep.subr.mxu0 0.0
        %1764 = vmatpush1.msra.mxu0 0.0
        %1765 = vmatprep.subr.mxu0 0.0
        %1766 = vmatpush1.msra.mxu0 0.0
        %1767 = vmatprep.subr.mxu0 0.0
        %1768 = vmatpush1.msra.mxu0 0.0
        %1769 = vmatprep.subr.mxu0 0.0
        %1770 = vmatpush1.msra.mxu0 0.0
        %1771 = vmatprep.subr.mxu0 0.0
        %1772 = vmatpush1.msra.mxu0 0.0
        %1773 = vmatprep.subr.mxu0 0.0
        %1774 = vmatpush1.msra.mxu0 0.0
        %1775 = vmatprep.subr.mxu0 0.0
        %1776 = vmatpush1.msra.mxu0 0.0
        %1777 = vmatprep.subr.mxu0 0.0
        %1778 = vmatpush1.msra.mxu0 0.0
        %1779 = vmatprep.subr.mxu0 0.0
        %1780 = vmatpush1.msra.mxu0 0.0
        %1781 = vmatprep.subr.mxu0 0.0
        %1782 = vmatpush1.msra.mxu0 0.0
        %1783 = vmatprep.subr.mxu0 0.0
        %1784 = vmatpush1.msra.mxu0 0.0
        %1785 = vmatprep.subr.mxu0 0.0
        %1786 = vmatpush1.msra.mxu0 0.0
        %1787 = vmatprep.subr.mxu0 0.0
        %1788 = vmatpush1.msra.mxu0 0.0
        %1789 = vmatprep.subr.mxu0 0.0
        %1790 = vmatpush1.msra.mxu0 0.0
        %1791 = vmatprep.subr.mxu0 0.0
        %1792 = vmatpush1.msra.mxu0 0.0
        %1793 = vmatprep.subr.mxu0 0.0
        %1794 = vmatpush1.msra.mxu0 0.0
        %1795 = vmatprep.subr.mxu0 0.0
        %1796 = vmatpush1.msra.mxu0 0.0
        %1797 = vmatprep.subr.mxu0 0.0
        %1798 = vmatpush1.msra.mxu0 0.0
        %1799 = vmatprep.subr.mxu0 0.0
        %1800 = vmatpush1.msra.mxu0 0.0
        %1801 = vmatprep.subr.mxu0 0.0
        %1802 = vmatpush1.msra.mxu0 0.0
        %1803 = vmatprep.subr.mxu0 0.0
        %1804 = vmatpush1.msra.mxu0 0.0
        %1805 = vmatprep.subr.mxu0 0.0
        %1806 = vmatpush1.msra.mxu0 0.0
        %1807 = vmatprep.subr.mxu0 0.0
        %1808 = vmatpush1.msra.mxu0 0.0
        %1809 = vmatprep.subr.mxu0 0.0
        %1810 = vmatpush1.msra.mxu0 0.0
        %1811 = vmatprep.mubr.f32.mxu0 0.0
        %v1812 = vand.u32 %v1583, 4294901760
        %v1813 = vsub.f32 %v1583, %v1812
        %1814 = vmatmul.mubr.f32.gmra.mrb[0].mxu0 %v1813
        %v1815 = vpop.f32.mrb[0].mxu0
        %v1816 = vadd.f32 %v1740, %v1815
        %v1817 = vpop.f32.mrb[0].mxu0
        %1818 = vdwg.mxu0
        %1819 = vmatprep.subr.mxu0 0.0
        %v1820 = vand.u32 %v199, 4294901760
        %1821 = vmatpush1.msra.mxu0 %v1820
        %1822 = vmatprep.subr.mxu0 0.0
        %v1823 = vand.u32 %v200, 4294901760
        %1824 = vmatpush1.msra.mxu0 %v1823
        %1825 = vmatprep.subr.mxu0 0.0
        %1826 = vmatpush1.msra.mxu0 0.0
        %1827 = vmatprep.subr.mxu0 0.0
        %1828 = vmatpush1.msra.mxu0 0.0
        %1829 = vmatprep.subr.mxu0 0.0
        %1830 = vmatpush1.msra.mxu0 0.0
        %1831 = vmatprep.subr.mxu0 0.0
        %1832 = vmatpush1.msra.mxu0 0.0
        %1833 = vmatprep.subr.mxu0 0.0
        %1834 = vmatpush1.msra.mxu0 0.0
        %1835 = vmatprep.subr.mxu0 0.0
        %1836 = vmatpush1.msra.mxu0 0.0
        %1837 = vmatprep.subr.mxu0 0.0
        %1838 = vmatpush1.msra.mxu0 0.0
        %1839 = vmatprep.subr.mxu0 0.0
        %1840 = vmatpush1.msra.mxu0 0.0
        %1841 = vmatprep.subr.mxu0 0.0
        %1842 = vmatpush1.msra.mxu0 0.0
        %1843 = vmatprep.subr.mxu0 0.0
        %1844 = vmatpush1.msra.mxu0 0.0
        %1845 = vmatprep.subr.mxu0 0.0
        %1846 = vmatpush1.msra.mxu0 0.0
        %1847 = vmatprep.subr.mxu0 0.0
        %1848 = vmatpush1.msra.mxu0 0.0
        %1849 = vmatprep.subr.mxu0 0.0
        %1850 = vmatpush1.msra.mxu0 0.0
        %1851 = vmatprep.subr.mxu0 0.0
        %1852 = vmatpush1.msra.mxu0 0.0
        %1853 = vmatprep.subr.mxu0 0.0
        %1854 = vmatpush1.msra.mxu0 0.0
        %1855 = vmatprep.subr.mxu0 0.0
        %1856 = vmatpush1.msra.mxu0 0.0
        %1857 = vmatprep.subr.mxu0 0.0
        %1858 = vmatpush1.msra.mxu0 0.0
        %1859 = vmatprep.subr.mxu0 0.0
        %1860 = vmatpush1.msra.mxu0 0.0
        %1861 = vmatprep.subr.mxu0 0.0
        %1862 = vmatpush1.msra.mxu0 0.0
        %1863 = vmatprep.subr.mxu0 0.0
        %1864 = vmatpush1.msra.mxu0 0.0
        %1865 = vmatprep.subr.mxu0 0.0
        %1866 = vmatpush1.msra.mxu0 0.0
        %1867 = vmatprep.subr.mxu0 0.0
        %1868 = vmatpush1.msra.mxu0 0.0
        %1869 = vmatprep.subr.mxu0 0.0
        %1870 = vmatpush1.msra.mxu0 0.0
        %1871 = vmatprep.subr.mxu0 0.0
        %1872 = vmatpush1.msra.mxu0 0.0
        %1873 = vmatprep.subr.mxu0 0.0
        %1874 = vmatpush1.msra.mxu0 0.0
        %1875 = vmatprep.subr.mxu0 0.0
        %1876 = vmatpush1.msra.mxu0 0.0
        %1877 = vmatprep.subr.mxu0 0.0
        %1878 = vmatpush1.msra.mxu0 0.0
        %1879 = vmatprep.subr.mxu0 0.0
        %1880 = vmatpush1.msra.mxu0 0.0
        %1881 = vmatprep.subr.mxu0 0.0
        %1882 = vmatpush1.msra.mxu0 0.0
        %1883 = vmatprep.subr.mxu0 0.0
        %1884 = vmatpush1.msra.mxu0 0.0
        %1885 = vmatprep.mubr.f32.mxu0 0.0
        %v1886 = vand.u32 %v1583, 4294901760
        %v1887 = vsub.f32 %v1583, %v1886
        %v1888 = vand.u32 %v1887, 4294901760
        %1889 = vmatmul.mubr.f32.gmra.mrb[0].mxu0 %v1888
        %v1890 = vpop.f32.mrb[0].mxu0
        %v1891 = vadd.f32 %v1816, %v1890
        %v1892 = vpop.f32.mrb[0].mxu0
        %1893 = vdwg.mxu0
        %1894 = vmatprep.subr.mxu0 0.0
        %v1895 = vand.u32 %v199, 4294901760
        %v1896 = vsub.f32 %v199, %v1895
        %v1897 = vand.u32 %v1896, 4294901760
        %1898 = vmatpush1.msra.mxu0 %v1897
        %1899 = vmatprep.subr.mxu0 0.0
        %v1900 = vand.u32 %v200, 4294901760
        %v1901 = vsub.f32 %v200, %v1900
        %v1902 = vand.u32 %v1901, 4294901760
        %1903 = vmatpush1.msra.mxu0 %v1902
        %1904 = vmatprep.subr.mxu0 0.0
        %1905 = vmatpush1.msra.mxu0 0.0
        %1906 = vmatprep.subr.mxu0 0.0
        %1907 = vmatpush1.msra.mxu0 0.0
        %1908 = vmatprep.subr.mxu0 0.0
        %1909 = vmatpush1.msra.mxu0 0.0
        %1910 = vmatprep.subr.mxu0 0.0
        %1911 = vmatpush1.msra.mxu0 0.0
        %1912 = vmatprep.subr.mxu0 0.0
        %1913 = vmatpush1.msra.mxu0 0.0
        %1914 = vmatprep.subr.mxu0 0.0
        %1915 = vmatpush1.msra.mxu0 0.0
        %1916 = vmatprep.subr.mxu0 0.0
        %1917 = vmatpush1.msra.mxu0 0.0
        %1918 = vmatprep.subr.mxu0 0.0
        %1919 = vmatpush1.msra.mxu0 0.0
        %1920 = vmatprep.subr.mxu0 0.0
        %1921 = vmatpush1.msra.mxu0 0.0
        %1922 = vmatprep.subr.mxu0 0.0
        %1923 = vmatpush1.msra.mxu0 0.0
        %1924 = vmatprep.subr.mxu0 0.0
        %1925 = vmatpush1.msra.mxu0 0.0
        %1926 = vmatprep.subr.mxu0 0.0
        %1927 = vmatpush1.msra.mxu0 0.0
        %1928 = vmatprep.subr.mxu0 0.0
        %1929 = vmatpush1.msra.mxu0 0.0
        %1930 = vmatprep.subr.mxu0 0.0
        %1931 = vmatpush1.msra.mxu0 0.0
        %1932 = vmatprep.subr.mxu0 0.0
        %1933 = vmatpush1.msra.mxu0 0.0
        %1934 = vmatprep.subr.mxu0 0.0
        %1935 = vmatpush1.msra.mxu0 0.0
        %1936 = vmatprep.subr.mxu0 0.0
        %1937 = vmatpush1.msra.mxu0 0.0
        %1938 = vmatprep.subr.mxu0 0.0
        %1939 = vmatpush1.msra.mxu0 0.0
        %1940 = vmatprep.subr.mxu0 0.0
        %1941 = vmatpush1.msra.mxu0 0.0
        %1942 = vmatprep.subr.mxu0 0.0
        %1943 = vmatpush1.msra.mxu0 0.0
        %1944 = vmatprep.subr.mxu0 0.0
        %1945 = vmatpush1.msra.mxu0 0.0
        %1946 = vmatprep.subr.mxu0 0.0
        %1947 = vmatpush1.msra.mxu0 0.0
        %1948 = vmatprep.subr.mxu0 0.0
        %1949 = vmatpush1.msra.mxu0 0.0
        %1950 = vmatprep.subr.mxu0 0.0
        %1951 = vmatpush1.msra.mxu0 0.0
        %1952 = vmatprep.subr.mxu0 0.0
        %1953 = vmatpush1.msra.mxu0 0.0
        %1954 = vmatprep.subr.mxu0 0.0
        %1955 = vmatpush1.msra.mxu0 0.0
        %1956 = vmatprep.subr.mxu0 0.0
        %1957 = vmatpush1.msra.mxu0 0.0
        %1958 = vmatprep.subr.mxu0 0.0
        %1959 = vmatpush1.msra.mxu0 0.0
        %1960 = vmatprep.subr.mxu0 0.0
        %1961 = vmatpush1.msra.mxu0 0.0
        %1962 = vmatprep.subr.mxu0 0.0
        %1963 = vmatpush1.msra.mxu0 0.0
        %1964 = vmatprep.mubr.f32.mxu0 0.0
        %v1965 = vand.u32 %v1583, 4294901760
        %1966 = vmatmul.mubr.f32.gmra.mrb[0].mxu0 %v1965
        %v1967 = vpop.f32.mrb[0].mxu0
        %v1968 = vadd.f32 %v1891, %v1967
        %v1969 = vpop.f32.mrb[0].mxu0
        %1970 = vdwg.mxu0
        %1971 = vmatprep.subr.mxu0 0.0
        %v1972 = vand.u32 %v199, 4294901760
        %1973 = vmatpush1.msra.mxu0 %v1972
        %1974 = vmatprep.subr.mxu0 0.0
        %v1975 = vand.u32 %v200, 4294901760
        %1976 = vmatpush1.msra.mxu0 %v1975
        %1977 = vmatprep.subr.mxu0 0.0
        %1978 = vmatpush1.msra.mxu0 0.0
        %1979 = vmatprep.subr.mxu0 0.0
        %1980 = vmatpush1.msra.mxu0 0.0
        %1981 = vmatprep.subr.mxu0 0.0
        %1982 = vmatpush1.msra.mxu0 0.0
        %1983 = vmatprep.subr.mxu0 0.0
        %1984 = vmatpush1.msra.mxu0 0.0
        %1985 = vmatprep.subr.mxu0 0.0
        %1986 = vmatpush1.msra.mxu0 0.0
        %1987 = vmatprep.subr.mxu0 0.0
        %1988 = vmatpush1.msra.mxu0 0.0
        %1989 = vmatprep.subr.mxu0 0.0
        %1990 = vmatpush1.msra.mxu0 0.0
        %1991 = vmatprep.subr.mxu0 0.0
        %1992 = vmatpush1.msra.mxu0 0.0
        %1993 = vmatprep.subr.mxu0 0.0
        %1994 = vmatpush1.msra.mxu0 0.0
        %1995 = vmatprep.subr.mxu0 0.0
        %1996 = vmatpush1.msra.mxu0 0.0
        %1997 = vmatprep.subr.mxu0 0.0
        %1998 = vmatpush1.msra.mxu0 0.0
        %1999 = vmatprep.subr.mxu0 0.0
        %2000 = vmatpush1.msra.mxu0 0.0
        %2001 = vmatprep.subr.mxu0 0.0
        %2002 = vmatpush1.msra.mxu0 0.0
        %2003 = vmatprep.subr.mxu0 0.0
        %2004 = vmatpush1.msra.mxu0 0.0
        %2005 = vmatprep.subr.mxu0 0.0
        %2006 = vmatpush1.msra.mxu0 0.0
        %2007 = vmatprep.subr.mxu0 0.0
        %2008 = vmatpush1.msra.mxu0 0.0
        %2009 = vmatprep.subr.mxu0 0.0
        %2010 = vmatpush1.msra.mxu0 0.0
        %2011 = vmatprep.subr.mxu0 0.0
        %2012 = vmatpush1.msra.mxu0 0.0
        %2013 = vmatprep.subr.mxu0 0.0
        %2014 = vmatpush1.msra.mxu0 0.0
        %2015 = vmatprep.subr.mxu0 0.0
        %2016 = vmatpush1.msra.mxu0 0.0
        %2017 = vmatprep.subr.mxu0 0.0
        %2018 = vmatpush1.msra.mxu0 0.0
        %2019 = vmatprep.subr.mxu0 0.0
        %2020 = vmatpush1.msra.mxu0 0.0
        %2021 = vmatprep.subr.mxu0 0.0
        %2022 = vmatpush1.msra.mxu0 0.0
        %2023 = vmatprep.subr.mxu0 0.0
        %2024 = vmatpush1.msra.mxu0 0.0
        %2025 = vmatprep.subr.mxu0 0.0
        %2026 = vmatpush1.msra.mxu0 0.0
        %2027 = vmatprep.subr.mxu0 0.0
        %2028 = vmatpush1.msra.mxu0 0.0
        %2029 = vmatprep.subr.mxu0 0.0
        %2030 = vmatpush1.msra.mxu0 0.0
        %2031 = vmatprep.subr.mxu0 0.0
        %2032 = vmatpush1.msra.mxu0 0.0
        %2033 = vmatprep.subr.mxu0 0.0
        %2034 = vmatpush1.msra.mxu0 0.0
        %2035 = vmatprep.subr.mxu0 0.0
        %2036 = vmatpush1.msra.mxu0 0.0
        %2037 = vmatprep.mubr.f32.mxu0 0.0
        %v2038 = vand.u32 %v1583, 4294901760
        %2039 = vmatmul.mubr.f32.gmra.mrb[0].mxu0 %v2038
        %v2040 = vpop.f32.mrb[0].mxu0
        %v2041 = vadd.f32 %v1968, %v2040
        %v2042 = vpop.f32.mrb[0].mxu0
        %2043 = vdwg.mxu0
        %v2045 = vsel %vm201, %v1120, 0
        %2047 = vmatprep.subr.mxu0 0.0
        %v2048 = vand.u32 %v199, 4294901760
        %2049 = vmatpush1.msra.mxu0 %v2048
        %2050 = vmatprep.subr.mxu0 0.0
        %v2051 = vand.u32 %v200, 4294901760
        %2052 = vmatpush1.msra.mxu0 %v2051
        %2053 = vmatprep.subr.mxu0 0.0
        %2054 = vmatpush1.msra.mxu0 0.0
        %2055 = vmatprep.subr.mxu0 0.0
        %2056 = vmatpush1.msra.mxu0 0.0
        %2057 = vmatprep.subr.mxu0 0.0
        %2058 = vmatpush1.msra.mxu0 0.0
        %2059 = vmatprep.subr.mxu0 0.0
        %2060 = vmatpush1.msra.mxu0 0.0
        %2061 = vmatprep.subr.mxu0 0.0
        %2062 = vmatpush1.msra.mxu0 0.0
        %2063 = vmatprep.subr.mxu0 0.0
        %2064 = vmatpush1.msra.mxu0 0.0
        %2065 = vmatprep.subr.mxu0 0.0
        %2066 = vmatpush1.msra.mxu0 0.0
        %2067 = vmatprep.subr.mxu0 0.0
        %2068 = vmatpush1.msra.mxu0 0.0
        %2069 = vmatprep.subr.mxu0 0.0
        %2070 = vmatpush1.msra.mxu0 0.0
        %2071 = vmatprep.subr.mxu0 0.0
        %2072 = vmatpush1.msra.mxu0 0.0
        %2073 = vmatprep.subr.mxu0 0.0
        %2074 = vmatpush1.msra.mxu0 0.0
        %2075 = vmatprep.subr.mxu0 0.0
        %2076 = vmatpush1.msra.mxu0 0.0
        %2077 = vmatprep.subr.mxu0 0.0
        %2078 = vmatpush1.msra.mxu0 0.0
        %2079 = vmatprep.subr.mxu0 0.0
        %2080 = vmatpush1.msra.mxu0 0.0
        %2081 = vmatprep.subr.mxu0 0.0
        %2082 = vmatpush1.msra.mxu0 0.0
        %2083 = vmatprep.subr.mxu0 0.0
        %2084 = vmatpush1.msra.mxu0 0.0
        %2085 = vmatprep.subr.mxu0 0.0
        %2086 = vmatpush1.msra.mxu0 0.0
        %2087 = vmatprep.subr.mxu0 0.0
        %2088 = vmatpush1.msra.mxu0 0.0
        %2089 = vmatprep.subr.mxu0 0.0
        %2090 = vmatpush1.msra.mxu0 0.0
        %2091 = vmatprep.subr.mxu0 0.0
        %2092 = vmatpush1.msra.mxu0 0.0
        %2093 = vmatprep.subr.mxu0 0.0
        %2094 = vmatpush1.msra.mxu0 0.0
        %2095 = vmatprep.subr.mxu0 0.0
        %2096 = vmatpush1.msra.mxu0 0.0
        %2097 = vmatprep.subr.mxu0 0.0
        %2098 = vmatpush1.msra.mxu0 0.0
        %2099 = vmatprep.subr.mxu0 0.0
        %2100 = vmatpush1.msra.mxu0 0.0
        %2101 = vmatprep.subr.mxu0 0.0
        %2102 = vmatpush1.msra.mxu0 0.0
        %2103 = vmatprep.subr.mxu0 0.0
        %2104 = vmatpush1.msra.mxu0 0.0
        %2105 = vmatprep.subr.mxu0 0.0
        %2106 = vmatpush1.msra.mxu0 0.0
        %2107 = vmatprep.subr.mxu0 0.0
        %2108 = vmatpush1.msra.mxu0 0.0
        %2109 = vmatprep.subr.mxu0 0.0
        %2110 = vmatpush1.msra.mxu0 0.0
        %2111 = vmatprep.subr.mxu0 0.0
        %2112 = vmatpush1.msra.mxu0 0.0
        %2113 = vmatprep.mubr.f32.mxu0 0.0
        %v2114 = vand.u32 %v2045, 4294901760
        %v2115 = vsub.f32 %v2045, %v2114
        %v2116 = vand.u32 %v2115, 4294901760
        %v2117 = vsub.f32 %v2115, %v2116
        %v2118 = vand.u32 %v2117, 4294901760
        %2119 = vmatmul.mubr.f32.gmra.mrb[0].mxu0 %v2118
        %v2120 = vpop.f32.mrb[0].mxu0
        %v2121 = vadd.f32 0.0, %v2120
        %v2122 = vpop.f32.mrb[0].mxu0
        %2123 = vdwg.mxu0
        %2124 = vmatprep.subr.mxu0 0.0
        %v2125 = vand.u32 %v199, 4294901760
        %v2126 = vsub.f32 %v199, %v2125
        %v2127 = vand.u32 %v2126, 4294901760
        %v2128 = vsub.f32 %v2126, %v2127
        %v2129 = vand.u32 %v2128, 4294901760
        %2130 = vmatpush1.msra.mxu0 %v2129
        %2131 = vmatprep.subr.mxu0 0.0
        %v2132 = vand.u32 %v200, 4294901760
        %v2133 = vsub.f32 %v200, %v2132
        %v2134 = vand.u32 %v2133, 4294901760
        %v2135 = vsub.f32 %v2133, %v2134
        %v2136 = vand.u32 %v2135, 4294901760
        %2137 = vmatpush1.msra.mxu0 %v2136
        %2138 = vmatprep.subr.mxu0 0.0
        %2139 = vmatpush1.msra.mxu0 0.0
        %2140 = vmatprep.subr.mxu0 0.0
        %2141 = vmatpush1.msra.mxu0 0.0
        %2142 = vmatprep.subr.mxu0 0.0
        %2143 = vmatpush1.msra.mxu0 0.0
        %2144 = vmatprep.subr.mxu0 0.0
        %2145 = vmatpush1.msra.mxu0 0.0
        %2146 = vmatprep.subr.mxu0 0.0
        %2147 = vmatpush1.msra.mxu0 0.0
        %2148 = vmatprep.subr.mxu0 0.0
        %2149 = vmatpush1.msra.mxu0 0.0
        %2150 = vmatprep.subr.mxu0 0.0
        %2151 = vmatpush1.msra.mxu0 0.0
        %2152 = vmatprep.subr.mxu0 0.0
        %2153 = vmatpush1.msra.mxu0 0.0
        %2154 = vmatprep.subr.mxu0 0.0
        %2155 = vmatpush1.msra.mxu0 0.0
        %2156 = vmatprep.subr.mxu0 0.0
        %2157 = vmatpush1.msra.mxu0 0.0
        %2158 = vmatprep.subr.mxu0 0.0
        %2159 = vmatpush1.msra.mxu0 0.0
        %2160 = vmatprep.subr.mxu0 0.0
        %2161 = vmatpush1.msra.mxu0 0.0
        %2162 = vmatprep.subr.mxu0 0.0
        %2163 = vmatpush1.msra.mxu0 0.0
        %2164 = vmatprep.subr.mxu0 0.0
        %2165 = vmatpush1.msra.mxu0 0.0
        %2166 = vmatprep.subr.mxu0 0.0
        %2167 = vmatpush1.msra.mxu0 0.0
        %2168 = vmatprep.subr.mxu0 0.0
        %2169 = vmatpush1.msra.mxu0 0.0
        %2170 = vmatprep.subr.mxu0 0.0
        %2171 = vmatpush1.msra.mxu0 0.0
        %2172 = vmatprep.subr.mxu0 0.0
        %2173 = vmatpush1.msra.mxu0 0.0
        %2174 = vmatprep.subr.mxu0 0.0
        %2175 = vmatpush1.msra.mxu0 0.0
        %2176 = vmatprep.subr.mxu0 0.0
        %2177 = vmatpush1.msra.mxu0 0.0
        %2178 = vmatprep.subr.mxu0 0.0
        %2179 = vmatpush1.msra.mxu0 0.0
        %2180 = vmatprep.subr.mxu0 0.0
        %2181 = vmatpush1.msra.mxu0 0.0
        %2182 = vmatprep.subr.mxu0 0.0
        %2183 = vmatpush1.msra.mxu0 0.0
        %2184 = vmatprep.subr.mxu0 0.0
        %2185 = vmatpush1.msra.mxu0 0.0
        %2186 = vmatprep.subr.mxu0 0.0
        %2187 = vmatpush1.msra.mxu0 0.0
        %2188 = vmatprep.subr.mxu0 0.0
        %2189 = vmatpush1.msra.mxu0 0.0
        %2190 = vmatprep.subr.mxu0 0.0
        %2191 = vmatpush1.msra.mxu0 0.0
        %2192 = vmatprep.subr.mxu0 0.0
        %2193 = vmatpush1.msra.mxu0 0.0
        %2194 = vmatprep.subr.mxu0 0.0
        %2195 = vmatpush1.msra.mxu0 0.0
        %2196 = vmatprep.subr.mxu0 0.0
        %2197 = vmatpush1.msra.mxu0 0.0
        %2198 = vmatprep.mubr.f32.mxu0 0.0
        %v2199 = vand.u32 %v2045, 4294901760
        %2200 = vmatmul.mubr.f32.gmra.mrb[0].mxu0 %v2199
        %v2201 = vpop.f32.mrb[0].mxu0
        %v2202 = vadd.f32 %v2121, %v2201
        %v2203 = vpop.f32.mrb[0].mxu0
        %2204 = vdwg.mxu0
        %2205 = vmatprep.subr.mxu0 0.0
        %v2206 = vand.u32 %v199, 4294901760
        %v2207 = vsub.f32 %v199, %v2206
        %2208 = vmatpush1.msra.mxu0 %v2207
        %2209 = vmatprep.subr.mxu0 0.0
        %v2210 = vand.u32 %v200, 4294901760
        %v2211 = vsub.f32 %v200, %v2210
        %2212 = vmatpush1.msra.mxu0 %v2211
        %2213 = vmatprep.subr.mxu0 0.0
        %2214 = vmatpush1.msra.mxu0 0.0
        %2215 = vmatprep.subr.mxu0 0.0
        %2216 = vmatpush1.msra.mxu0 0.0
        %2217 = vmatprep.subr.mxu0 0.0
        %2218 = vmatpush1.msra.mxu0 0.0
        %2219 = vmatprep.subr.mxu0 0.0
        %2220 = vmatpush1.msra.mxu0 0.0
        %2221 = vmatprep.subr.mxu0 0.0
        %2222 = vmatpush1.msra.mxu0 0.0
        %2223 = vmatprep.subr.mxu0 0.0
        %2224 = vmatpush1.msra.mxu0 0.0
        %2225 = vmatprep.subr.mxu0 0.0
        %2226 = vmatpush1.msra.mxu0 0.0
        %2227 = vmatprep.subr.mxu0 0.0
        %2228 = vmatpush1.msra.mxu0 0.0
        %2229 = vmatprep.subr.mxu0 0.0
        %2230 = vmatpush1.msra.mxu0 0.0
        %2231 = vmatprep.subr.mxu0 0.0
        %2232 = vmatpush1.msra.mxu0 0.0
        %2233 = vmatprep.subr.mxu0 0.0
        %2234 = vmatpush1.msra.mxu0 0.0
        %2235 = vmatprep.subr.mxu0 0.0
        %2236 = vmatpush1.msra.mxu0 0.0
        %2237 = vmatprep.subr.mxu0 0.0
        %2238 = vmatpush1.msra.mxu0 0.0
        %2239 = vmatprep.subr.mxu0 0.0
        %2240 = vmatpush1.msra.mxu0 0.0
        %2241 = vmatprep.subr.mxu0 0.0
        %2242 = vmatpush1.msra.mxu0 0.0
        %2243 = vmatprep.subr.mxu0 0.0
        %2244 = vmatpush1.msra.mxu0 0.0
        %2245 = vmatprep.subr.mxu0 0.0
        %2246 = vmatpush1.msra.mxu0 0.0
        %2247 = vmatprep.subr.mxu0 0.0
        %2248 = vmatpush1.msra.mxu0 0.0
        %2249 = vmatprep.subr.mxu0 0.0
        %2250 = vmatpush1.msra.mxu0 0.0
        %2251 = vmatprep.subr.mxu0 0.0
        %2252 = vmatpush1.msra.mxu0 0.0
        %2253 = vmatprep.subr.mxu0 0.0
        %2254 = vmatpush1.msra.mxu0 0.0
        %2255 = vmatprep.subr.mxu0 0.0
        %2256 = vmatpush1.msra.mxu0 0.0
        %2257 = vmatprep.subr.mxu0 0.0
        %2258 = vmatpush1.msra.mxu0 0.0
        %2259 = vmatprep.subr.mxu0 0.0
        %2260 = vmatpush1.msra.mxu0 0.0
        %2261 = vmatprep.subr.mxu0 0.0
        %2262 = vmatpush1.msra.mxu0 0.0
        %2263 = vmatprep.subr.mxu0 0.0
        %2264 = vmatpush1.msra.mxu0 0.0
        %2265 = vmatprep.subr.mxu0 0.0
        %2266 = vmatpush1.msra.mxu0 0.0
        %2267 = vmatprep.subr.mxu0 0.0
        %2268 = vmatpush1.msra.mxu0 0.0
        %2269 = vmatprep.subr.mxu0 0.0
        %2270 = vmatpush1.msra.mxu0 0.0
        %2271 = vmatprep.subr.mxu0 0.0
        %2272 = vmatpush1.msra.mxu0 0.0
        %2273 = vmatprep.mubr.f32.mxu0 0.0
        %v2274 = vand.u32 %v2045, 4294901760
        %v2275 = vsub.f32 %v2045, %v2274
        %2276 = vmatmul.mubr.f32.gmra.mrb[0].mxu0 %v2275
        %v2277 = vpop.f32.mrb[0].mxu0
        %v2278 = vadd.f32 %v2202, %v2277
        %v2279 = vpop.f32.mrb[0].mxu0
        %2280 = vdwg.mxu0
        %2281 = vmatprep.subr.mxu0 0.0
        %v2282 = vand.u32 %v199, 4294901760
        %2283 = vmatpush1.msra.mxu0 %v2282
        %2284 = vmatprep.subr.mxu0 0.0
        %v2285 = vand.u32 %v200, 4294901760
        %2286 = vmatpush1.msra.mxu0 %v2285
        %2287 = vmatprep.subr.mxu0 0.0
        %2288 = vmatpush1.msra.mxu0 0.0
        %2289 = vmatprep.subr.mxu0 0.0
        %2290 = vmatpush1.msra.mxu0 0.0
        %2291 = vmatprep.subr.mxu0 0.0
        %2292 = vmatpush1.msra.mxu0 0.0
        %2293 = vmatprep.subr.mxu0 0.0
        %2294 = vmatpush1.msra.mxu0 0.0
        %2295 = vmatprep.subr.mxu0 0.0
        %2296 = vmatpush1.msra.mxu0 0.0
        %2297 = vmatprep.subr.mxu0 0.0
        %2298 = vmatpush1.msra.mxu0 0.0
        %2299 = vmatprep.subr.mxu0 0.0
        %2300 = vmatpush1.msra.mxu0 0.0
        %2301 = vmatprep.subr.mxu0 0.0
        %2302 = vmatpush1.msra.mxu0 0.0
        %2303 = vmatprep.subr.mxu0 0.0
        %2304 = vmatpush1.msra.mxu0 0.0
        %2305 = vmatprep.subr.mxu0 0.0
        %2306 = vmatpush1.msra.mxu0 0.0
        %2307 = vmatprep.subr.mxu0 0.0
        %2308 = vmatpush1.msra.mxu0 0.0
        %2309 = vmatprep.subr.mxu0 0.0
        %2310 = vmatpush1.msra.mxu0 0.0
        %2311 = vmatprep.subr.mxu0 0.0
        %2312 = vmatpush1.msra.mxu0 0.0
        %2313 = vmatprep.subr.mxu0 0.0
        %2314 = vmatpush1.msra.mxu0 0.0
        %2315 = vmatprep.subr.mxu0 0.0
        %2316 = vmatpush1.msra.mxu0 0.0
        %2317 = vmatprep.subr.mxu0 0.0
        %2318 = vmatpush1.msra.mxu0 0.0
        %2319 = vmatprep.subr.mxu0 0.0
        %2320 = vmatpush1.msra.mxu0 0.0
        %2321 = vmatprep.subr.mxu0 0.0
        %2322 = vmatpush1.msra.mxu0 0.0
        %2323 = vmatprep.subr.mxu0 0.0
        %2324 = vmatpush1.msra.mxu0 0.0
        %2325 = vmatprep.subr.mxu0 0.0
        %2326 = vmatpush1.msra.mxu0 0.0
        %2327 = vmatprep.subr.mxu0 0.0
        %2328 = vmatpush1.msra.mxu0 0.0
        %2329 = vmatprep.subr.mxu0 0.0
        %2330 = vmatpush1.msra.mxu0 0.0
        %2331 = vmatprep.subr.mxu0 0.0
        %2332 = vmatpush1.msra.mxu0 0.0
        %2333 = vmatprep.subr.mxu0 0.0
        %2334 = vmatpush1.msra.mxu0 0.0
        %2335 = vmatprep.subr.mxu0 0.0
        %2336 = vmatpush1.msra.mxu0 0.0
        %2337 = vmatprep.subr.mxu0 0.0
        %2338 = vmatpush1.msra.mxu0 0.0
        %2339 = vmatprep.subr.mxu0 0.0
        %2340 = vmatpush1.msra.mxu0 0.0
        %2341 = vmatprep.subr.mxu0 0.0
        %2342 = vmatpush1.msra.mxu0 0.0
        %2343 = vmatprep.subr.mxu0 0.0
        %2344 = vmatpush1.msra.mxu0 0.0
        %2345 = vmatprep.subr.mxu0 0.0
        %2346 = vmatpush1.msra.mxu0 0.0
        %2347 = vmatprep.mubr.f32.mxu0 0.0
        %v2348 = vand.u32 %v2045, 4294901760
        %v2349 = vsub.f32 %v2045, %v2348
        %v2350 = vand.u32 %v2349, 4294901760
        %2351 = vmatmul.mubr.f32.gmra.mrb[0].mxu0 %v2350
        %v2352 = vpop.f32.mrb[0].mxu0
        %v2353 = vadd.f32 %v2278, %v2352
        %v2354 = vpop.f32.mrb[0].mxu0
        %2355 = vdwg.mxu0
        %2356 = vmatprep.subr.mxu0 0.0
        %v2357 = vand.u32 %v199, 4294901760
        %v2358 = vsub.f32 %v199, %v2357
        %v2359 = vand.u32 %v2358, 4294901760
        %2360 = vmatpush1.msra.mxu0 %v2359
        %2361 = vmatprep.subr.mxu0 0.0
        %v2362 = vand.u32 %v200, 4294901760
        %v2363 = vsub.f32 %v200, %v2362
        %v2364 = vand.u32 %v2363, 4294901760
        %2365 = vmatpush1.msra.mxu0 %v2364
        %2366 = vmatprep.subr.mxu0 0.0
        %2367 = vmatpush1.msra.mxu0 0.0
        %2368 = vmatprep.subr.mxu0 0.0
        %2369 = vmatpush1.msra.mxu0 0.0
        %2370 = vmatprep.subr.mxu0 0.0
        %2371 = vmatpush1.msra.mxu0 0.0
        %2372 = vmatprep.subr.mxu0 0.0
        %2373 = vmatpush1.msra.mxu0 0.0
        %2374 = vmatprep.subr.mxu0 0.0
        %2375 = vmatpush1.msra.mxu0 0.0
        %2376 = vmatprep.subr.mxu0 0.0
        %2377 = vmatpush1.msra.mxu0 0.0
        %2378 = vmatprep.subr.mxu0 0.0
        %2379 = vmatpush1.msra.mxu0 0.0
        %2380 = vmatprep.subr.mxu0 0.0
        %2381 = vmatpush1.msra.mxu0 0.0
        %2382 = vmatprep.subr.mxu0 0.0
        %2383 = vmatpush1.msra.mxu0 0.0
        %2384 = vmatprep.subr.mxu0 0.0
        %2385 = vmatpush1.msra.mxu0 0.0
        %2386 = vmatprep.subr.mxu0 0.0
        %2387 = vmatpush1.msra.mxu0 0.0
        %2388 = vmatprep.subr.mxu0 0.0
        %2389 = vmatpush1.msra.mxu0 0.0
        %2390 = vmatprep.subr.mxu0 0.0
        %2391 = vmatpush1.msra.mxu0 0.0
        %2392 = vmatprep.subr.mxu0 0.0
        %2393 = vmatpush1.msra.mxu0 0.0
        %2394 = vmatprep.subr.mxu0 0.0
        %2395 = vmatpush1.msra.mxu0 0.0
        %2396 = vmatprep.subr.mxu0 0.0
        %2397 = vmatpush1.msra.mxu0 0.0
        %2398 = vmatprep.subr.mxu0 0.0
        %2399 = vmatpush1.msra.mxu0 0.0
        %2400 = vmatprep.subr.mxu0 0.0
        %2401 = vmatpush1.msra.mxu0 0.0
        %2402 = vmatprep.subr.mxu0 0.0
        %2403 = vmatpush1.msra.mxu0 0.0
        %2404 = vmatprep.subr.mxu0 0.0
        %2405 = vmatpush1.msra.mxu0 0.0
        %2406 = vmatprep.subr.mxu0 0.0
        %2407 = vmatpush1.msra.mxu0 0.0
        %2408 = vmatprep.subr.mxu0 0.0
        %2409 = vmatpush1.msra.mxu0 0.0
        %2410 = vmatprep.subr.mxu0 0.0
        %2411 = vmatpush1.msra.mxu0 0.0
        %2412 = vmatprep.subr.mxu0 0.0
        %2413 = vmatpush1.msra.mxu0 0.0
        %2414 = vmatprep.subr.mxu0 0.0
        %2415 = vmatpush1.msra.mxu0 0.0
        %2416 = vmatprep.subr.mxu0 0.0
        %2417 = vmatpush1.msra.mxu0 0.0
        %2418 = vmatprep.subr.mxu0 0.0
        %2419 = vmatpush1.msra.mxu0 0.0
        %2420 = vmatprep.subr.mxu0 0.0
        %2421 = vmatpush1.msra.mxu0 0.0
        %2422 = vmatprep.subr.mxu0 0.0
        %2423 = vmatpush1.msra.mxu0 0.0
        %2424 = vmatprep.subr.mxu0 0.0
        %2425 = vmatpush1.msra.mxu0 0.0
        %2426 = vmatprep.mubr.f32.mxu0 0.0
        %v2427 = vand.u32 %v2045, 4294901760
        %2428 = vmatmul.mubr.f32.gmra.mrb[0].mxu0 %v2427
        %v2429 = vpop.f32.mrb[0].mxu0
        %v2430 = vadd.f32 %v2353, %v2429
        %v2431 = vpop.f32.mrb[0].mxu0
        %2432 = vdwg.mxu0
        %2433 = vmatprep.subr.mxu0 0.0
        %v2434 = vand.u32 %v199, 4294901760
        %2435 = vmatpush1.msra.mxu0 %v2434
        %2436 = vmatprep.subr.mxu0 0.0
        %v2437 = vand.u32 %v200, 4294901760
        %2438 = vmatpush1.msra.mxu0 %v2437
        %2439 = vmatprep.subr.mxu0 0.0
        %2440 = vmatpush1.msra.mxu0 0.0
        %2441 = vmatprep.subr.mxu0 0.0
        %2442 = vmatpush1.msra.mxu0 0.0
        %2443 = vmatprep.subr.mxu0 0.0
        %2444 = vmatpush1.msra.mxu0 0.0
        %2445 = vmatprep.subr.mxu0 0.0
        %2446 = vmatpush1.msra.mxu0 0.0
        %2447 = vmatprep.subr.mxu0 0.0
        %2448 = vmatpush1.msra.mxu0 0.0
        %2449 = vmatprep.subr.mxu0 0.0
        %2450 = vmatpush1.msra.mxu0 0.0
        %2451 = vmatprep.subr.mxu0 0.0
        %2452 = vmatpush1.msra.mxu0 0.0
        %2453 = vmatprep.subr.mxu0 0.0
        %2454 = vmatpush1.msra.mxu0 0.0
        %2455 = vmatprep.subr.mxu0 0.0
        %2456 = vmatpush1.msra.mxu0 0.0
        %2457 = vmatprep.subr.mxu0 0.0
        %2458 = vmatpush1.msra.mxu0 0.0
        %2459 = vmatprep.subr.mxu0 0.0
        %2460 = vmatpush1.msra.mxu0 0.0
        %2461 = vmatprep.subr.mxu0 0.0
        %2462 = vmatpush1.msra.mxu0 0.0
        %2463 = vmatprep.subr.mxu0 0.0
        %2464 = vmatpush1.msra.mxu0 0.0
        %2465 = vmatprep.subr.mxu0 0.0
        %2466 = vmatpush1.msra.mxu0 0.0
        %2467 = vmatprep.subr.mxu0 0.0
        %2468 = vmatpush1.msra.mxu0 0.0
        %2469 = vmatprep.subr.mxu0 0.0
        %2470 = vmatpush1.msra.mxu0 0.0
        %2471 = vmatprep.subr.mxu0 0.0
        %2472 = vmatpush1.msra.mxu0 0.0
        %2473 = vmatprep.subr.mxu0 0.0
        %2474 = vmatpush1.msra.mxu0 0.0
        %2475 = vmatprep.subr.mxu0 0.0
        %2476 = vmatpush1.msra.mxu0 0.0
        %2477 = vmatprep.subr.mxu0 0.0
        %2478 = vmatpush1.msra.mxu0 0.0
        %2479 = vmatprep.subr.mxu0 0.0
        %2480 = vmatpush1.msra.mxu0 0.0
        %2481 = vmatprep.subr.mxu0 0.0
        %2482 = vmatpush1.msra.mxu0 0.0
        %2483 = vmatprep.subr.mxu0 0.0
        %2484 = vmatpush1.msra.mxu0 0.0
        %2485 = vmatprep.subr.mxu0 0.0
        %2486 = vmatpush1.msra.mxu0 0.0
        %2487 = vmatprep.subr.mxu0 0.0
        %2488 = vmatpush1.msra.mxu0 0.0
        %2489 = vmatprep.subr.mxu0 0.0
        %2490 = vmatpush1.msra.mxu0 0.0
        %2491 = vmatprep.subr.mxu0 0.0
        %2492 = vmatpush1.msra.mxu0 0.0
        %2493 = vmatprep.subr.mxu0 0.0
        %2494 = vmatpush1.msra.mxu0 0.0
        %2495 = vmatprep.subr.mxu0 0.0
        %2496 = vmatpush1.msra.mxu0 0.0
        %2497 = vmatprep.subr.mxu0 0.0
        %2498 = vmatpush1.msra.mxu0 0.0
        %2499 = vmatprep.mubr.f32.mxu0 0.0
        %v2500 = vand.u32 %v2045, 4294901760
        %2501 = vmatmul.mubr.f32.gmra.mrb[0].mxu0 %v2500
        %v2502 = vpop.f32.mrb[0].mxu0
        %v2503 = vadd.f32 %v2430, %v2502
        %v2504 = vpop.f32.mrb[0].mxu0
        %2505 = vdwg.mxu0
        %v2507 = vsel %vm201, %v1579, 0
        %2509 = vmatprep.subr.mxu0 0.0
        %v2510 = vand.u32 %v199, 4294901760
        %2511 = vmatpush1.msra.mxu0 %v2510
        %2512 = vmatprep.subr.mxu0 0.0
        %v2513 = vand.u32 %v200, 4294901760
        %2514 = vmatpush1.msra.mxu0 %v2513
        %2515 = vmatprep.subr.mxu0 0.0
        %2516 = vmatpush1.msra.mxu0 0.0
        %2517 = vmatprep.subr.mxu0 0.0
        %2518 = vmatpush1.msra.mxu0 0.0
        %2519 = vmatprep.subr.mxu0 0.0
        %2520 = vmatpush1.msra.mxu0 0.0
        %2521 = vmatprep.subr.mxu0 0.0
        %2522 = vmatpush1.msra.mxu0 0.0
        %2523 = vmatprep.subr.mxu0 0.0
        %2524 = vmatpush1.msra.mxu0 0.0
        %2525 = vmatprep.subr.mxu0 0.0
        %2526 = vmatpush1.msra.mxu0 0.0
        %2527 = vmatprep.subr.mxu0 0.0
        %2528 = vmatpush1.msra.mxu0 0.0
        %2529 = vmatprep.subr.mxu0 0.0
        %2530 = vmatpush1.msra.mxu0 0.0
        %2531 = vmatprep.subr.mxu0 0.0
        %2532 = vmatpush1.msra.mxu0 0.0
        %2533 = vmatprep.subr.mxu0 0.0
        %2534 = vmatpush1.msra.mxu0 0.0
        %2535 = vmatprep.subr.mxu0 0.0
        %2536 = vmatpush1.msra.mxu0 0.0
        %2537 = vmatprep.subr.mxu0 0.0
        %2538 = vmatpush1.msra.mxu0 0.0
        %2539 = vmatprep.subr.mxu0 0.0
        %2540 = vmatpush1.msra.mxu0 0.0
        %2541 = vmatprep.subr.mxu0 0.0
        %2542 = vmatpush1.msra.mxu0 0.0
        %2543 = vmatprep.subr.mxu0 0.0
        %2544 = vmatpush1.msra.mxu0 0.0
        %2545 = vmatprep.subr.mxu0 0.0
        %2546 = vmatpush1.msra.mxu0 0.0
        %2547 = vmatprep.subr.mxu0 0.0
        %2548 = vmatpush1.msra.mxu0 0.0
        %2549 = vmatprep.subr.mxu0 0.0
        %2550 = vmatpush1.msra.mxu0 0.0
        %2551 = vmatprep.subr.mxu0 0.0
        %2552 = vmatpush1.msra.mxu0 0.0
        %2553 = vmatprep.subr.mxu0 0.0
        %2554 = vmatpush1.msra.mxu0 0.0
        %2555 = vmatprep.subr.mxu0 0.0
        %2556 = vmatpush1.msra.mxu0 0.0
        %2557 = vmatprep.subr.mxu0 0.0
        %2558 = vmatpush1.msra.mxu0 0.0
        %2559 = vmatprep.subr.mxu0 0.0
        %2560 = vmatpush1.msra.mxu0 0.0
        %2561 = vmatprep.subr.mxu0 0.0
        %2562 = vmatpush1.msra.mxu0 0.0
        %2563 = vmatprep.subr.mxu0 0.0
        %2564 = vmatpush1.msra.mxu0 0.0
        %2565 = vmatprep.subr.mxu0 0.0
        %2566 = vmatpush1.msra.mxu0 0.0
        %2567 = vmatprep.subr.mxu0 0.0
        %2568 = vmatpush1.msra.mxu0 0.0
        %2569 = vmatprep.subr.mxu0 0.0
        %2570 = vmatpush1.msra.mxu0 0.0
        %2571 = vmatprep.subr.mxu0 0.0
        %2572 = vmatpush1.msra.mxu0 0.0
        %2573 = vmatprep.subr.mxu0 0.0
        %2574 = vmatpush1.msra.mxu0 0.0
        %2575 = vmatprep.mubr.f32.mxu0 0.0
        %v2576 = vand.u32 %v2507, 4294901760
        %v2577 = vsub.f32 %v2507, %v2576
        %v2578 = vand.u32 %v2577, 4294901760
        %v2579 = vsub.f32 %v2577, %v2578
        %v2580 = vand.u32 %v2579, 4294901760
        %2581 = vmatmul.mubr.f32.gmra.mrb[0].mxu0 %v2580
        %v2582 = vpop.f32.mrb[0].mxu0
        %v2583 = vadd.f32 0.0, %v2582
        %v2584 = vpop.f32.mrb[0].mxu0
        %2585 = vdwg.mxu0
        %2586 = vmatprep.subr.mxu0 0.0
        %v2587 = vand.u32 %v199, 4294901760
        %v2588 = vsub.f32 %v199, %v2587
        %v2589 = vand.u32 %v2588, 4294901760
        %v2590 = vsub.f32 %v2588, %v2589
        %v2591 = vand.u32 %v2590, 4294901760
        %2592 = vmatpush1.msra.mxu0 %v2591
        %2593 = vmatprep.subr.mxu0 0.0
        %v2594 = vand.u32 %v200, 4294901760
        %v2595 = vsub.f32 %v200, %v2594
        %v2596 = vand.u32 %v2595, 4294901760
        %v2597 = vsub.f32 %v2595, %v2596
        %v2598 = vand.u32 %v2597, 4294901760
        %2599 = vmatpush1.msra.mxu0 %v2598
        %2600 = vmatprep.subr.mxu0 0.0
        %2601 = vmatpush1.msra.mxu0 0.0
        %2602 = vmatprep.subr.mxu0 0.0
        %2603 = vmatpush1.msra.mxu0 0.0
        %2604 = vmatprep.subr.mxu0 0.0
        %2605 = vmatpush1.msra.mxu0 0.0
        %2606 = vmatprep.subr.mxu0 0.0
        %2607 = vmatpush1.msra.mxu0 0.0
        %2608 = vmatprep.subr.mxu0 0.0
        %2609 = vmatpush1.msra.mxu0 0.0
        %2610 = vmatprep.subr.mxu0 0.0
        %2611 = vmatpush1.msra.mxu0 0.0
        %2612 = vmatprep.subr.mxu0 0.0
        %2613 = vmatpush1.msra.mxu0 0.0
        %2614 = vmatprep.subr.mxu0 0.0
        %2615 = vmatpush1.msra.mxu0 0.0
        %2616 = vmatprep.subr.mxu0 0.0
        %2617 = vmatpush1.msra.mxu0 0.0
        %2618 = vmatprep.subr.mxu0 0.0
        %2619 = vmatpush1.msra.mxu0 0.0
        %2620 = vmatprep.subr.mxu0 0.0
        %2621 = vmatpush1.msra.mxu0 0.0
        %2622 = vmatprep.subr.mxu0 0.0
        %2623 = vmatpush1.msra.mxu0 0.0
        %2624 = vmatprep.subr.mxu0 0.0
        %2625 = vmatpush1.msra.mxu0 0.0
        %2626 = vmatprep.subr.mxu0 0.0
        %2627 = vmatpush1.msra.mxu0 0.0
        %2628 = vmatprep.subr.mxu0 0.0
        %2629 = vmatpush1.msra.mxu0 0.0
        %2630 = vmatprep.subr.mxu0 0.0
        %2631 = vmatpush1.msra.mxu0 0.0
        %2632 = vmatprep.subr.mxu0 0.0
        %2633 = vmatpush1.msra.mxu0 0.0
        %2634 = vmatprep.subr.mxu0 0.0
        %2635 = vmatpush1.msra.mxu0 0.0
        %2636 = vmatprep.subr.mxu0 0.0
        %2637 = vmatpush1.msra.mxu0 0.0
        %2638 = vmatprep.subr.mxu0 0.0
        %2639 = vmatpush1.msra.mxu0 0.0
        %2640 = vmatprep.subr.mxu0 0.0
        %2641 = vmatpush1.msra.mxu0 0.0
        %2642 = vmatprep.subr.mxu0 0.0
        %2643 = vmatpush1.msra.mxu0 0.0
        %2644 = vmatprep.subr.mxu0 0.0
        %2645 = vmatpush1.msra.mxu0 0.0
        %2646 = vmatprep.subr.mxu0 0.0
        %2647 = vmatpush1.msra.mxu0 0.0
        %2648 = vmatprep.subr.mxu0 0.0
        %2649 = vmatpush1.msra.mxu0 0.0
        %2650 = vmatprep.subr.mxu0 0.0
        %2651 = vmatpush1.msra.mxu0 0.0
        %2652 = vmatprep.subr.mxu0 0.0
        %2653 = vmatpush1.msra.mxu0 0.0
        %2654 = vmatprep.subr.mxu0 0.0
        %2655 = vmatpush1.msra.mxu0 0.0
        %2656 = vmatprep.subr.mxu0 0.0
        %2657 = vmatpush1.msra.mxu0 0.0
        %2658 = vmatprep.subr.mxu0 0.0
        %2659 = vmatpush1.msra.mxu0 0.0
        %2660 = vmatprep.mubr.f32.mxu0 0.0
        %v2661 = vand.u32 %v2507, 4294901760
        %2662 = vmatmul.mubr.f32.gmra.mrb[0].mxu0 %v2661
        %v2663 = vpop.f32.mrb[0].mxu0
        %v2664 = vadd.f32 %v2583, %v2663
        %v2665 = vpop.f32.mrb[0].mxu0
        %2666 = vdwg.mxu0
        %2667 = vmatprep.subr.mxu0 0.0
        %v2668 = vand.u32 %v199, 4294901760
        %v2669 = vsub.f32 %v199, %v2668
        %2670 = vmatpush1.msra.mxu0 %v2669
        %2671 = vmatprep.subr.mxu0 0.0
        %v2672 = vand.u32 %v200, 4294901760
        %v2673 = vsub.f32 %v200, %v2672
        %2674 = vmatpush1.msra.mxu0 %v2673
        %2675 = vmatprep.subr.mxu0 0.0
        %2676 = vmatpush1.msra.mxu0 0.0
        %2677 = vmatprep.subr.mxu0 0.0
        %2678 = vmatpush1.msra.mxu0 0.0
        %2679 = vmatprep.subr.mxu0 0.0
        %2680 = vmatpush1.msra.mxu0 0.0
        %2681 = vmatprep.subr.mxu0 0.0
        %2682 = vmatpush1.msra.mxu0 0.0
        %2683 = vmatprep.subr.mxu0 0.0
        %2684 = vmatpush1.msra.mxu0 0.0
        %2685 = vmatprep.subr.mxu0 0.0
        %2686 = vmatpush1.msra.mxu0 0.0
        %2687 = vmatprep.subr.mxu0 0.0
        %2688 = vmatpush1.msra.mxu0 0.0
        %2689 = vmatprep.subr.mxu0 0.0
        %2690 = vmatpush1.msra.mxu0 0.0
        %2691 = vmatprep.subr.mxu0 0.0
        %2692 = vmatpush1.msra.mxu0 0.0
        %2693 = vmatprep.subr.mxu0 0.0
        %2694 = vmatpush1.msra.mxu0 0.0
        %2695 = vmatprep.subr.mxu0 0.0
        %2696 = vmatpush1.msra.mxu0 0.0
        %2697 = vmatprep.subr.mxu0 0.0
        %2698 = vmatpush1.msra.mxu0 0.0
        %2699 = vmatprep.subr.mxu0 0.0
        %2700 = vmatpush1.msra.mxu0 0.0
        %2701 = vmatprep.subr.mxu0 0.0
        %2702 = vmatpush1.msra.mxu0 0.0
        %2703 = vmatprep.subr.mxu0 0.0
        %2704 = vmatpush1.msra.mxu0 0.0
        %2705 = vmatprep.subr.mxu0 0.0
        %2706 = vmatpush1.msra.mxu0 0.0
        %2707 = vmatprep.subr.mxu0 0.0
        %2708 = vmatpush1.msra.mxu0 0.0
        %2709 = vmatprep.subr.mxu0 0.0
        %2710 = vmatpush1.msra.mxu0 0.0
        %2711 = vmatprep.subr.mxu0 0.0
        %2712 = vmatpush1.msra.mxu0 0.0
        %2713 = vmatprep.subr.mxu0 0.0
        %2714 = vmatpush1.msra.mxu0 0.0
        %2715 = vmatprep.subr.mxu0 0.0
        %2716 = vmatpush1.msra.mxu0 0.0
        %2717 = vmatprep.subr.mxu0 0.0
        %2718 = vmatpush1.msra.mxu0 0.0
        %2719 = vmatprep.subr.mxu0 0.0
        %2720 = vmatpush1.msra.mxu0 0.0
        %2721 = vmatprep.subr.mxu0 0.0
        %2722 = vmatpush1.msra.mxu0 0.0
        %2723 = vmatprep.subr.mxu0 0.0
        %2724 = vmatpush1.msra.mxu0 0.0
        %2725 = vmatprep.subr.mxu0 0.0
        %2726 = vmatpush1.msra.mxu0 0.0
        %2727 = vmatprep.subr.mxu0 0.0
        %2728 = vmatpush1.msra.mxu0 0.0
        %2729 = vmatprep.subr.mxu0 0.0
        %2730 = vmatpush1.msra.mxu0 0.0
        %2731 = vmatprep.subr.mxu0 0.0
        %2732 = vmatpush1.msra.mxu0 0.0
        %2733 = vmatprep.subr.mxu0 0.0
        %2734 = vmatpush1.msra.mxu0 0.0
        %2735 = vmatprep.mubr.f32.mxu0 0.0
        %v2736 = vand.u32 %v2507, 4294901760
        %v2737 = vsub.f32 %v2507, %v2736
        %2738 = vmatmul.mubr.f32.gmra.mrb[0].mxu0 %v2737
        %v2739 = vpop.f32.mrb[0].mxu0
        %v2740 = vadd.f32 %v2664, %v2739
        %v2741 = vpop.f32.mrb[0].mxu0
        %2742 = vdwg.mxu0
        %2743 = vmatprep.subr.mxu0 0.0
        %v2744 = vand.u32 %v199, 4294901760
        %2745 = vmatpush1.msra.mxu0 %v2744
        %2746 = vmatprep.subr.mxu0 0.0
        %v2747 = vand.u32 %v200, 4294901760
        %2748 = vmatpush1.msra.mxu0 %v2747
        %2749 = vmatprep.subr.mxu0 0.0
        %2750 = vmatpush1.msra.mxu0 0.0
        %2751 = vmatprep.subr.mxu0 0.0
        %2752 = vmatpush1.msra.mxu0 0.0
        %2753 = vmatprep.subr.mxu0 0.0
        %2754 = vmatpush1.msra.mxu0 0.0
        %2755 = vmatprep.subr.mxu0 0.0
        %2756 = vmatpush1.msra.mxu0 0.0
        %2757 = vmatprep.subr.mxu0 0.0
        %2758 = vmatpush1.msra.mxu0 0.0
        %2759 = vmatprep.subr.mxu0 0.0
        %2760 = vmatpush1.msra.mxu0 0.0
        %2761 = vmatprep.subr.mxu0 0.0
        %2762 = vmatpush1.msra.mxu0 0.0
        %2763 = vmatprep.subr.mxu0 0.0
        %2764 = vmatpush1.msra.mxu0 0.0
        %2765 = vmatprep.subr.mxu0 0.0
        %2766 = vmatpush1.msra.mxu0 0.0
        %2767 = vmatprep.subr.mxu0 0.0
        %2768 = vmatpush1.msra.mxu0 0.0
        %2769 = vmatprep.subr.mxu0 0.0
        %2770 = vmatpush1.msra.mxu0 0.0
        %2771 = vmatprep.subr.mxu0 0.0
        %2772 = vmatpush1.msra.mxu0 0.0
        %2773 = vmatprep.subr.mxu0 0.0
        %2774 = vmatpush1.msra.mxu0 0.0
        %2775 = vmatprep.subr.mxu0 0.0
        %2776 = vmatpush1.msra.mxu0 0.0
        %2777 = vmatprep.subr.mxu0 0.0
        %2778 = vmatpush1.msra.mxu0 0.0
        %2779 = vmatprep.subr.mxu0 0.0
        %2780 = vmatpush1.msra.mxu0 0.0
        %2781 = vmatprep.subr.mxu0 0.0
        %2782 = vmatpush1.msra.mxu0 0.0
        %2783 = vmatprep.subr.mxu0 0.0
        %2784 = vmatpush1.msra.mxu0 0.0
        %2785 = vmatprep.subr.mxu0 0.0
        %2786 = vmatpush1.msra.mxu0 0.0
        %2787 = vmatprep.subr.mxu0 0.0
        %2788 = vmatpush1.msra.mxu0 0.0
        %2789 = vmatprep.subr.mxu0 0.0
        %2790 = vmatpush1.msra.mxu0 0.0
        %2791 = vmatprep.subr.mxu0 0.0
        %2792 = vmatpush1.msra.mxu0 0.0
        %2793 = vmatprep.subr.mxu0 0.0
        %2794 = vmatpush1.msra.mxu0 0.0
        %2795 = vmatprep.subr.mxu0 0.0
        %2796 = vmatpush1.msra.mxu0 0.0
        %2797 = vmatprep.subr.mxu0 0.0
        %2798 = vmatpush1.msra.mxu0 0.0
        %2799 = vmatprep.subr.mxu0 0.0
        %2800 = vmatpush1.msra.mxu0 0.0
        %2801 = vmatprep.subr.mxu0 0.0
        %2802 = vmatpush1.msra.mxu0 0.0
        %2803 = vmatprep.subr.mxu0 0.0
        %2804 = vmatpush1.msra.mxu0 0.0
        %2805 = vmatprep.subr.mxu0 0.0
        %2806 = vmatpush1.msra.mxu0 0.0
        %2807 = vmatprep.subr.mxu0 0.0
        %2808 = vmatpush1.msra.mxu0 0.0
        %2809 = vmatprep.mubr.f32.mxu0 0.0
        %v2810 = vand.u32 %v2507, 4294901760
        %v2811 = vsub.f32 %v2507, %v2810
        %v2812 = vand.u32 %v2811, 4294901760
        %2813 = vmatmul.mubr.f32.gmra.mrb[0].mxu0 %v2812
        %v2814 = vpop.f32.mrb[0].mxu0
        %v2815 = vadd.f32 %v2740, %v2814
        %v2816 = vpop.f32.mrb[0].mxu0
        %2817 = vdwg.mxu0
        %2818 = vmatprep.subr.mxu0 0.0
        %v2819 = vand.u32 %v199, 4294901760
        %v2820 = vsub.f32 %v199, %v2819
        %v2821 = vand.u32 %v2820, 4294901760
        %2822 = vmatpush1.msra.mxu0 %v2821
        %2823 = vmatprep.subr.mxu0 0.0
        %v2824 = vand.u32 %v200, 4294901760
        %v2825 = vsub.f32 %v200, %v2824
        %v2826 = vand.u32 %v2825, 4294901760
        %2827 = vmatpush1.msra.mxu0 %v2826
        %2828 = vmatprep.subr.mxu0 0.0
        %2829 = vmatpush1.msra.mxu0 0.0
        %2830 = vmatprep.subr.mxu0 0.0
        %2831 = vmatpush1.msra.mxu0 0.0
        %2832 = vmatprep.subr.mxu0 0.0
        %2833 = vmatpush1.msra.mxu0 0.0
        %2834 = vmatprep.subr.mxu0 0.0
        %2835 = vmatpush1.msra.mxu0 0.0
        %2836 = vmatprep.subr.mxu0 0.0
        %2837 = vmatpush1.msra.mxu0 0.0
        %2838 = vmatprep.subr.mxu0 0.0
        %2839 = vmatpush1.msra.mxu0 0.0
        %2840 = vmatprep.subr.mxu0 0.0
        %2841 = vmatpush1.msra.mxu0 0.0
        %2842 = vmatprep.subr.mxu0 0.0
        %2843 = vmatpush1.msra.mxu0 0.0
        %2844 = vmatprep.subr.mxu0 0.0
        %2845 = vmatpush1.msra.mxu0 0.0
        %2846 = vmatprep.subr.mxu0 0.0
        %2847 = vmatpush1.msra.mxu0 0.0
        %2848 = vmatprep.subr.mxu0 0.0
        %2849 = vmatpush1.msra.mxu0 0.0
        %2850 = vmatprep.subr.mxu0 0.0
        %2851 = vmatpush1.msra.mxu0 0.0
        %2852 = vmatprep.subr.mxu0 0.0
        %2853 = vmatpush1.msra.mxu0 0.0
        %2854 = vmatprep.subr.mxu0 0.0
        %2855 = vmatpush1.msra.mxu0 0.0
        %2856 = vmatprep.subr.mxu0 0.0
        %2857 = vmatpush1.msra.mxu0 0.0
        %2858 = vmatprep.subr.mxu0 0.0
        %2859 = vmatpush1.msra.mxu0 0.0
        %2860 = vmatprep.subr.mxu0 0.0
        %2861 = vmatpush1.msra.mxu0 0.0
        %2862 = vmatprep.subr.mxu0 0.0
        %2863 = vmatpush1.msra.mxu0 0.0
        %2864 = vmatprep.subr.mxu0 0.0
        %2865 = vmatpush1.msra.mxu0 0.0
        %2866 = vmatprep.subr.mxu0 0.0
        %2867 = vmatpush1.msra.mxu0 0.0
        %2868 = vmatprep.subr.mxu0 0.0
        %2869 = vmatpush1.msra.mxu0 0.0
        %2870 = vmatprep.subr.mxu0 0.0
        %2871 = vmatpush1.msra.mxu0 0.0
        %2872 = vmatprep.subr.mxu0 0.0
        %2873 = vmatpush1.msra.mxu0 0.0
        %2874 = vmatprep.subr.mxu0 0.0
        %2875 = vmatpush1.msra.mxu0 0.0
        %2876 = vmatprep.subr.mxu0 0.0
        %2877 = vmatpush1.msra.mxu0 0.0
        %2878 = vmatprep.subr.mxu0 0.0
        %2879 = vmatpush1.msra.mxu0 0.0
        %2880 = vmatprep.subr.mxu0 0.0
        %2881 = vmatpush1.msra.mxu0 0.0
        %2882 = vmatprep.subr.mxu0 0.0
        %2883 = vmatpush1.msra.mxu0 0.0
        %2884 = vmatprep.subr.mxu0 0.0
        %2885 = vmatpush1.msra.mxu0 0.0
        %2886 = vmatprep.subr.mxu0 0.0
        %2887 = vmatpush1.msra.mxu0 0.0
        %2888 = vmatprep.mubr.f32.mxu0 0.0
        %v2889 = vand.u32 %v2507, 4294901760
        %2890 = vmatmul.mubr.f32.gmra.mrb[0].mxu0 %v2889
        %v2891 = vpop.f32.mrb[0].mxu0
        %v2892 = vadd.f32 %v2815, %v2891
        %v2893 = vpop.f32.mrb[0].mxu0
        %2894 = vdwg.mxu0
        %2895 = vmatprep.subr.mxu0 0.0
        %v2896 = vand.u32 %v199, 4294901760
        %2897 = vmatpush1.msra.mxu0 %v2896
        %2898 = vmatprep.subr.mxu0 0.0
        %v2899 = vand.u32 %v200, 4294901760
        %2900 = vmatpush1.msra.mxu0 %v2899
        %2901 = vmatprep.subr.mxu0 0.0
        %2902 = vmatpush1.msra.mxu0 0.0
        %2903 = vmatprep.subr.mxu0 0.0
        %2904 = vmatpush1.msra.mxu0 0.0
        %2905 = vmatprep.subr.mxu0 0.0
        %2906 = vmatpush1.msra.mxu0 0.0
        %2907 = vmatprep.subr.mxu0 0.0
        %2908 = vmatpush1.msra.mxu0 0.0
        %2909 = vmatprep.subr.mxu0 0.0
        %2910 = vmatpush1.msra.mxu0 0.0
        %2911 = vmatprep.subr.mxu0 0.0
        %2912 = vmatpush1.msra.mxu0 0.0
        %2913 = vmatprep.subr.mxu0 0.0
        %2914 = vmatpush1.msra.mxu0 0.0
        %2915 = vmatprep.subr.mxu0 0.0
        %2916 = vmatpush1.msra.mxu0 0.0
        %2917 = vmatprep.subr.mxu0 0.0
        %2918 = vmatpush1.msra.mxu0 0.0
        %2919 = vmatprep.subr.mxu0 0.0
        %2920 = vmatpush1.msra.mxu0 0.0
        %2921 = vmatprep.subr.mxu0 0.0
        %2922 = vmatpush1.msra.mxu0 0.0
        %2923 = vmatprep.subr.mxu0 0.0
        %2924 = vmatpush1.msra.mxu0 0.0
        %2925 = vmatprep.subr.mxu0 0.0
        %2926 = vmatpush1.msra.mxu0 0.0
        %2927 = vmatprep.subr.mxu0 0.0
        %2928 = vmatpush1.msra.mxu0 0.0
        %2929 = vmatprep.subr.mxu0 0.0
        %2930 = vmatpush1.msra.mxu0 0.0
        %2931 = vmatprep.subr.mxu0 0.0
        %2932 = vmatpush1.msra.mxu0 0.0
        %2933 = vmatprep.subr.mxu0 0.0
        %2934 = vmatpush1.msra.mxu0 0.0
        %2935 = vmatprep.subr.mxu0 0.0
        %2936 = vmatpush1.msra.mxu0 0.0
        %2937 = vmatprep.subr.mxu0 0.0
        %2938 = vmatpush1.msra.mxu0 0.0
        %2939 = vmatprep.subr.mxu0 0.0
        %2940 = vmatpush1.msra.mxu0 0.0
        %2941 = vmatprep.subr.mxu0 0.0
        %2942 = vmatpush1.msra.mxu0 0.0
        %2943 = vmatprep.subr.mxu0 0.0
        %2944 = vmatpush1.msra.mxu0 0.0
        %2945 = vmatprep.subr.mxu0 0.0
        %2946 = vmatpush1.msra.mxu0 0.0
        %2947 = vmatprep.subr.mxu0 0.0
        %2948 = vmatpush1.msra.mxu0 0.0
        %2949 = vmatprep.subr.mxu0 0.0
        %2950 = vmatpush1.msra.mxu0 0.0
        %2951 = vmatprep.subr.mxu0 0.0
        %2952 = vmatpush1.msra.mxu0 0.0
        %2953 = vmatprep.subr.mxu0 0.0
        %2954 = vmatpush1.msra.mxu0 0.0
        %2955 = vmatprep.subr.mxu0 0.0
        %2956 = vmatpush1.msra.mxu0 0.0
        %2957 = vmatprep.subr.mxu0 0.0
        %2958 = vmatpush1.msra.mxu0 0.0
        %2959 = vmatprep.subr.mxu0 0.0
        %2960 = vmatpush1.msra.mxu0 0.0
        %2961 = vmatprep.mubr.f32.mxu0 0.0
        %v2962 = vand.u32 %v2507, 4294901760
        %2963 = vmatmul.mubr.f32.gmra.mrb[0].mxu0 %v2962
        %v2964 = vpop.f32.mrb[0].mxu0
        %v2965 = vadd.f32 %v2892, %v2964
        %v2966 = vpop.f32.mrb[0].mxu0
        %2967 = vdwg.mxu0
        %vm2968 = vcmask 64512
        %2969 = vst.msk [vmem:[%s189] sm:$0xff] %vm2968, %v2041
        %2970 = vst.msk [vmem:[%s189 + $0x8] sm:$0xff] %vm2968, %v2503
        %2971 = vst.msk [vmem:[%s189 + $0x10] sm:$0xff] %vm2968, %v2965
        %s2972 = sand.u32 %s96, 1
        %s2973 = scalar_lea.sflag [#allocation4], %s2972
        %s2974 = sand.u32 %s96, 1
        %s2975 = smul.addr %s2974, 24
        %s2976 = scalar_lea.vmem [#allocation5], %s2975
        // Predicated region
        $region37: #{tpu_custom_call.1} parent=31 // pred_check
          %p2977 = pneg %p106
        $region38: #{tpu_custom_call.1} parent=31 // pred_check_branch
          %2979 = sbr.rel (%p2977) target = $region40
        $region39: #{tpu_custom_call.1} parent=31 // pred_region
          %s2980 = smul.u32 3, %s20
          %s2982 = ssub.s32 384, 384
          %2983 = vsyncadd %s2973, %s2982
          %s2984 = smul.addr %s2980, 128
          %s2985 = scalar_lea.hbm %s3, %s2984
          %s2986 = sshll.u32 %s2976, 4
          %s2987 = int_to_ptr.vmem [resolvable:$true] %s2986
          %2992 = dma.vmem_to_hbm [thread:$0]  %s2987, 384, %s2985, %s2973, 128, 128, 8
        $region40: #{tpu_custom_call.1} parent=31 // pred_fallthru
          _
      $region32: #{tpu_custom_call.1} parent=5 // pred_fallthru
        _
      %p2993 = scmp.le.s32.totalorder 2, %s15
      // Predicated region
      $region41: #{tpu_custom_call.1} parent=5 // pred_check
        %p2994 = pneg %p2993
      $region42: #{tpu_custom_call.1} parent=5 // pred_check_branch
        %2996 = sbr.rel (%p2994) target = $region44
      $region43: #{tpu_custom_call.1} parent=5 // pred_region
        %s2997 = ssub.s32 %s15, 2
        // Predicated region
        $region45: #{tpu_custom_call.1} parent=43 // pred_check
          %p2998 = pneg %p112
        $region46: #{tpu_custom_call.1} parent=43 // pred_check_branch
          %3000 = sbr.rel (%p2998) target = $region48
        $region47: #{tpu_custom_call.1} parent=43 // pred_region
          %s3001 = sand.u32 %s97, 1
          %s3002 = scalar_lea.sflag [#allocation4], %s3001
          %s3003 = sand.u32 %s97, 1
          %s3004 = smul.addr %s3003, 24
          %s3005 = scalar_lea.vmem [#allocation5], %s3004
          %3006 = dma.done %s3002, 384
        $region48: #{tpu_custom_call.1} parent=43 // pred_fallthru
          _
      $region44: #{tpu_custom_call.1} parent=5 // pred_fallthru
        _
    $region6: #{tpu_custom_call.1} parent=1 // loop_footer
      %s19 = sadd.s32 1, %s15
    $region7: #{tpu_custom_call.1} parent=1 // loop_footer_branch
      %14 = sbr.rel target = $region3
    $region8: #{tpu_custom_call.1} parent=1 // loop_exit
      _
    %3007 = vsyncpa [#allocation3], 1
    %s3008 = scalar_lea.sflag [#allocation3], 1
    %3009 = vsyncpa %s3008, 1
    %3010 = vsyncpa [#allocation4], 1
    %s3011 = scalar_lea.sflag [#allocation4], 1
    %3012 = vsyncpa %s3011, 1

</llo_original>
